<compile_context>
chip_gen: v7x
topology: tpu7x:2x2x1
jax: 0.10.0
libtpu: 0.0.40
codegen_flags: <defaults>
</compile_context>

<pallas_src>
import functools

import jax
import jax.numpy as jnp
from jax.experimental import pallas as pl
from jax.experimental.pallas import tpu as pltpu


def _round_up(x, m):
    return (x + m - 1) // m * m


def _block_kernel(x_ref, w_ref, p_ref, o_ref, im2col_ref, zc_ref,
                  *, H, W, Wp, cpg, cin_p, eps):
    # x_ref:      [1, Cin_p, S_pad] bf16  zero-padded image, spatial on lanes
    # w_ref:      [Ct, 9*Cin_p]     bf16  conv taps, K order = (dy, dx, cin)
    # p_ref:      [Ct, 3]           f32   (conv bias, gn gamma, gn beta)
    # o_ref:      [1, Ct, H*W]      f32   lane-dense NCHW-flattened output
    # im2col_ref: [9*Cin_p, S_v]    bf16  K-fused tap matrix (scratch)
    # zc_ref:     [Ct, H*W]         f32   compacted conv output (scratch)
    s_v = H * Wp
    ct = o_ref.shape[1]

    # Build the K-fused im2col matrix once per image (independent of the
    # channel-tile axis j, which iterates innermost and is "arbitrary").
    @pl.when(pl.program_id(1) == 0)
    def _build_taps():
        for dy in range(3):
            for dx in range(3):
                k = dy * 3 + dx
                off = dy * Wp + dx
                im2col_ref[k * cin_p:(k + 1) * cin_p, :] = \
                    x_ref[0, :, off:off + s_v]

    # 3x3 conv as ONE MXU matmul: [Ct, 9*Cin_p] x [9*Cin_p, S_v] -> f32.
    z = jnp.dot(w_ref[...], im2col_ref[...],
                preferred_element_type=jnp.float32)           # [Ct, S_v]

    # Drop the Wp-W wrap-around columns in VMEM (never reach stats or HBM).
    for y in range(H):
        zc_ref[:, y * W:(y + 1) * W] = z[:, y * Wp:y * Wp + W]
    zc = zc_ref[...]                                          # [Ct, H*W]

    # --- GroupNorm statistics (all columns valid) -------------------------
    s_c = jnp.sum(zc, axis=1, keepdims=True)                  # [Ct, 1]
    q_c = jnp.sum(zc * zc, axis=1, keepdims=True)             # [Ct, 1]

    bias = p_ref[:, 0:1]
    gamma = p_ref[:, 1:2]
    beta = p_ref[:, 2:3]

    n_valid = float(H * W)
    sum_y = s_c + n_valid * bias                # conv bias folded analytically
    sumsq_y = q_c + 2.0 * bias * s_c + n_valid * bias * bias

    # Group aggregation: block one-hot built in-kernel (iota + thresholds,
    # no integer vector div); result is the group moment broadcast to channels.
    ch_i = jax.lax.broadcasted_iota(jnp.int32, (ct, 1), 0)
    ch_j = jax.lax.broadcasted_iota(jnp.int32, (1, ct), 1)
    gid_i = jnp.zeros((ct, 1), jnp.float32)
    gid_j = jnp.zeros((1, ct), jnp.float32)
    for g in range(1, ct // cpg):
        thr = g * cpg
        gid_i = gid_i + (ch_i >= thr).astype(jnp.float32)
        gid_j = gid_j + (ch_j >= thr).astype(jnp.float32)
    pmat = (gid_i == gid_j).astype(jnp.float32)               # [Ct, Ct]

    inv_cnt = 1.0 / (n_valid * cpg)
    mean_c = jnp.dot(pmat, sum_y, preferred_element_type=jnp.float32) * inv_cnt
    msq_c = jnp.dot(pmat, sumsq_y, preferred_element_type=jnp.float32) * inv_cnt
    var_c = jnp.maximum(msq_c - mean_c * mean_c, 0.0)
    a_c = jax.lax.rsqrt(var_c + eps) * gamma                  # [Ct, 1]
    b_c = beta + (bias - mean_c) * a_c                        # [Ct, 1]
    yn = zc * a_c + b_c                                       # [Ct, H*W]

    # --- Mish: x * tanh(softplus(x)) with a single transcendental ---------
    t = jnp.exp(-jnp.abs(yn))
    t2 = t * t
    pos = yn >= 0.0
    num = jnp.where(pos, 1.0, t2) + 2.0 * t
    den = num + jnp.where(pos, 2.0 * t2, 2.0)
    o_ref[0] = (yn * num * pl.reciprocal(den, approx=True)).astype(o_ref.dtype)


def block_forward(x_nchw, weight, bias, gamma, beta, groups=8, eps=1e-5):
    """Conv2d(3x3, pad=1) + GroupNorm + Mish.
    x_nchw: [N, Cin, H, W]; weight: [Cout, Cin, 3, 3] (PyTorch OIHW)."""
    n, cin, h, w = x_nchw.shape
    cout = weight.shape[0]
    assert cout % groups == 0, "GroupNorm requires dim_out % groups == 0"
    cpg = cout // groups

    hp, wp = h + 2, w + 2
    s_v = h * wp                                  # extended (wrap) conv columns
    s_pad = _round_up(hp * wp + 2, 128)           # lane-padded spatial extent
    cin_p = max(16, _round_up(cin, 16))           # bf16 sublane-aligned taps

    # --- pre-pass: pad only (no transpose), flatten spatial, cast to bf16 ---
    xp = jnp.pad(x_nchw, ((0, 0), (0, cin_p - cin), (1, 1), (1, 1)))
    xp = xp.reshape(n, cin_p, hp * wp)
    xp = jnp.pad(xp, ((0, 0), (0, 0), (0, s_pad - hp * wp)))
    xp = xp.astype(jnp.bfloat16)                  # [N, Cin_p, S_pad]

    # conv weight OIHW -> [Cout, (dy, dx, cin_p)] bf16 (matches im2col order)
    w_p = jnp.pad(weight, ((0, 0), (0, cin_p - cin), (0, 0), (0, 0)))
    w2 = jnp.transpose(w_p, (0, 2, 3, 1)).reshape(cout, 9 * cin_p)
    w2 = w2.astype(jnp.bfloat16)

    # conv bias + GroupNorm affine packed into one tiny per-channel table
    params = jnp.stack([bias, gamma, beta], axis=1).astype(jnp.float32)

    # Whole-group channel tiles: GroupNorm stays tile-local and per-step VMEM
    # is bounded at large Cout (v7x: 64 MiB physical).  One tile at small Cout.
    if cout <= 256:
        ct = cout
    else:
        ct = cpg
        for d in range(256, cpg - 1, -1):
            if cout % d == 0 and d % cpg == 0:
                ct = d
                break
    n_ct = cout // ct

    kernel = functools.partial(_block_kernel, H=h, W=w, Wp=wp, cpg=cpg,
                               cin_p=cin_p, eps=eps)
    flops = 2 * n * cout * s_v * 9 * cin_p
    bytes_acc = (n * n_ct * cin_p * s_pad * 2 + cout * 9 * cin_p * 2
                 + n * cout * h * w * 4 + cout * 3 * 4)
    out = pl.pallas_call(
        kernel,
        out_shape=jax.ShapeDtypeStruct((n, cout, h * w), jnp.float32),
        grid_spec=pltpu.PrefetchScalarGridSpec(
            num_scalar_prefetch=0,
            grid=(n, n_ct),
            in_specs=[
                pl.BlockSpec((1, cin_p, s_pad), lambda i, j: (i, 0, 0)),
                pl.BlockSpec((ct, 9 * cin_p), lambda i, j: (j, 0)),
                pl.BlockSpec((ct, 3), lambda i, j: (j, 0)),
            ],
            out_specs=pl.BlockSpec((1, ct, h * w), lambda i, j: (i, j, 0)),
            scratch_shapes=[
                pltpu.VMEM((9 * cin_p, s_v), jnp.bfloat16),
                pltpu.VMEM((ct, h * w), jnp.float32),
            ],
        ),
        compiler_params=pltpu.CompilerParams(
            dimension_semantics=("parallel", "arbitrary"),
            vmem_limit_bytes=64 * 1024 * 1024),
        cost_estimate=pl.CostEstimate(
            flops=flops, transcendentals=n * cout * h * w,
            bytes_accessed=bytes_acc),
    )(xp, w2, params)

    # post-pass: pure metadata reshape (no HBM slice / transpose pass)
    return out.reshape(n, cout, h, w)


# ------------------- pure-JAX reference for verification -------------------
def block_reference(x_nchw, weight, bias, gamma, beta, groups=8, eps=1e-5):
    n, cin, h, w = x_nchw.shape
    cout = weight.shape[0]
    y = jax.lax.conv_general_dilated(
        x_nchw.astype(jnp.float32), weight.astype(jnp.float32),
        window_strides=(1, 1), padding=((1, 1), (1, 1)),
        dimension_numbers=("NCHW", "OIHW", "NCHW"))
    y = y + bias.reshape(1, cout, 1, 1)
    yg = y.reshape(n, groups, -1)
    mean = jnp.mean(yg, axis=-1, keepdims=True)
    var = jnp.mean((yg - mean) ** 2, axis=-1, keepdims=True)
    yn = ((yg - mean) * jax.lax.rsqrt(var + eps)).reshape(n, cout, h, w)
    yn = yn * gamma.reshape(1, cout, 1, 1) + beta.reshape(1, cout, 1, 1)
    sp = jnp.logaddexp(yn, 0.0)
    return yn * jnp.tanh(sp)


if __name__ == "__main__":
    key = jax.random.PRNGKey(0)
    k1, k2, k3, k4, k5 = jax.random.split(key, 5)

    N, DIM, DIM_OUT, H, W, GROUPS = 2, 4, 16, 16, 16, 8

    x = jax.random.normal(k1, (N, DIM, H, W), dtype=jnp.float32)
    weight = 0.2 * jax.random.normal(k2, (DIM_OUT, DIM, 3, 3), dtype=jnp.float32)
    bias = 0.1 * jax.random.normal(k3, (DIM_OUT,), dtype=jnp.float32)
    gamma = 1.0 + 0.05 * jax.random.normal(k4, (DIM_OUT,), dtype=jnp.float32)
    beta = 0.05 * jax.random.normal(k5, (DIM_OUT,), dtype=jnp.float32)

    out = block_forward(x, weight, bias, gamma, beta, groups=GROUPS)
    out = jax.block_until_ready(out)

    ref = jax.block_until_ready(
        block_reference(x, weight, bias, gamma, beta, groups=GROUPS))
    assert out.shape == (N, DIM_OUT, H, W)
    # bf16 MXU operands + approx reciprocal -> compare to the f32 reference
    # with a correspondingly loosened tolerance.
    max_err = float(jnp.max(jnp.abs(out - ref)))
    assert jnp.allclose(out, ref, atol=5e-2, rtol=5e-2), max_err

    print("KERNEL_OK")
</pallas_src>

<mosaic_0001>
module attributes {stable_mosaic.version = 11 : i64} {
  func.func @_block_kernel(%arg0: i32, %arg1: i32, %arg2: memref<1x16x384xbf16, #tpu.memory_space<vmem>>, %arg3: memref<16x144xbf16, #tpu.memory_space<vmem>>, %arg4: memref<16x3xf32, #tpu.memory_space<vmem>>, %arg5: memref<1x16x256xf32, #tpu.memory_space<vmem>>, %arg6: memref<144x288xbf16, #tpu.memory_space<vmem>>, %arg7: memref<16x256xf32, #tpu.memory_space<vmem>>) attributes {dimension_semantics = [#tpu.dimension_semantics<parallel>, #tpu.dimension_semantics<arbitrary>], iteration_bounds = array<i64: 2, 1>, scalar_prefetch = 0 : i64, scratch_operands = 2 : i64, tpu.core_type = #tpu.core_type<tc>, window_params = [{transform_indices = @transform_0, window_bounds = array<i64: 1, 16, 384>}, {transform_indices = @transform_1, window_bounds = array<i64: 16, 144>}, {transform_indices = @transform_2, window_bounds = array<i64: 16, 3>}, {transform_indices = @transform_3, window_bounds = array<i64: 1, 16, 256>}]} {
    %c0_i32 = arith.constant 0 : i32
    %0 = arith.cmpi eq, %arg1, %c0_i32 : i32
    %1 = arith.extui %0 : i1 to i32
    %c0_i32_0 = arith.constant 0 : i32
    %2 = arith.cmpi ne, %1, %c0_i32_0 : i32
    scf.if %2 {
      %c0_56 = arith.constant 0 : index
      %c0_57 = arith.constant 0 : index
      %c0_58 = arith.constant 0 : index
      %181 = vector.load %arg2[%c0_56, %c0_57, %c0_58] : memref<1x16x384xbf16, #tpu.memory_space<vmem>>, vector<1x16x288xbf16>
      %182 = vector.shape_cast %181 : vector<1x16x288xbf16> to vector<16x288xbf16>
      %c0_59 = arith.constant 0 : index
      %c0_60 = arith.constant 0 : index
      %183 = vector.load %arg6[%c0_59, %c0_60] : memref<144x288xbf16, #tpu.memory_space<vmem>>, vector<16x288xbf16>
      tpu.vector_store %arg6[%c0_59, %c0_60], %182 {strides = array<i32>} : memref<144x288xbf16, #tpu.memory_space<vmem>>, vector<16x288xbf16>,
      %c0_61 = arith.constant 0 : index
      %c0_62 = arith.constant 0 : index
      %c1_63 = arith.constant 1 : index
      %184 = vector.load %arg2[%c0_61, %c0_62, %c1_63] : memref<1x16x384xbf16, #tpu.memory_space<vmem>>, vector<1x16x288xbf16>
      %185 = vector.shape_cast %184 : vector<1x16x288xbf16> to vector<16x288xbf16>
      %c16_64 = arith.constant 16 : index
      %c0_65 = arith.constant 0 : index
      %186 = vector.load %arg6[%c16_64, %c0_65] : memref<144x288xbf16, #tpu.memory_space<vmem>>, vector<16x288xbf16>
      tpu.vector_store %arg6[%c16_64, %c0_65], %185 {strides = array<i32>} : memref<144x288xbf16, #tpu.memory_space<vmem>>, vector<16x288xbf16>,
      %c0_66 = arith.constant 0 : index
      %c0_67 = arith.constant 0 : index
      %c2_68 = arith.constant 2 : index
      %187 = vector.load %arg2[%c0_66, %c0_67, %c2_68] : memref<1x16x384xbf16, #tpu.memory_space<vmem>>, vector<1x16x288xbf16>
      %188 = vector.shape_cast %187 : vector<1x16x288xbf16> to vector<16x288xbf16>
      %c32_69 = arith.constant 32 : index
      %c0_70 = arith.constant 0 : index
      %189 = vector.load %arg6[%c32_69, %c0_70] : memref<144x288xbf16, #tpu.memory_space<vmem>>, vector<16x288xbf16>
      tpu.vector_store %arg6[%c32_69, %c0_70], %188 {strides = array<i32>} : memref<144x288xbf16, #tpu.memory_space<vmem>>, vector<16x288xbf16>,
      %c0_71 = arith.constant 0 : index
      %c0_72 = arith.constant 0 : index
      %c18 = arith.constant 18 : index
      %190 = vector.load %arg2[%c0_71, %c0_72, %c18] : memref<1x16x384xbf16, #tpu.memory_space<vmem>>, vector<1x16x288xbf16>
      %191 = vector.shape_cast %190 : vector<1x16x288xbf16> to vector<16x288xbf16>
      %c48_73 = arith.constant 48 : index
      %c0_74 = arith.constant 0 : index
      %192 = vector.load %arg6[%c48_73, %c0_74] : memref<144x288xbf16, #tpu.memory_space<vmem>>, vector<16x288xbf16>
      tpu.vector_store %arg6[%c48_73, %c0_74], %191 {strides = array<i32>} : memref<144x288xbf16, #tpu.memory_space<vmem>>, vector<16x288xbf16>,
      %c0_75 = arith.constant 0 : index
      %c0_76 = arith.constant 0 : index
      %c19 = arith.constant 19 : index
      %193 = vector.load %arg2[%c0_75, %c0_76, %c19] : memref<1x16x384xbf16, #tpu.memory_space<vmem>>, vector<1x16x288xbf16>
      %194 = vector.shape_cast %193 : vector<1x16x288xbf16> to vector<16x288xbf16>
      %c64_77 = arith.constant 64 : index
      %c0_78 = arith.constant 0 : index
      %195 = vector.load %arg6[%c64_77, %c0_78] : memref<144x288xbf16, #tpu.memory_space<vmem>>, vector<16x288xbf16>
      tpu.vector_store %arg6[%c64_77, %c0_78], %194 {strides = array<i32>} : memref<144x288xbf16, #tpu.memory_space<vmem>>, vector<16x288xbf16>,
      %c0_79 = arith.constant 0 : index
      %c0_80 = arith.constant 0 : index
      %c20 = arith.constant 20 : index
      %196 = vector.load %arg2[%c0_79, %c0_80, %c20] : memref<1x16x384xbf16, #tpu.memory_space<vmem>>, vector<1x16x288xbf16>
      %197 = vector.shape_cast %196 : vector<1x16x288xbf16> to vector<16x288xbf16>
      %c80_81 = arith.constant 80 : index
      %c0_82 = arith.constant 0 : index
      %198 = vector.load %arg6[%c80_81, %c0_82] : memref<144x288xbf16, #tpu.memory_space<vmem>>, vector<16x288xbf16>
      tpu.vector_store %arg6[%c80_81, %c0_82], %197 {strides = array<i32>} : memref<144x288xbf16, #tpu.memory_space<vmem>>, vector<16x288xbf16>,
      %c0_83 = arith.constant 0 : index
      %c0_84 = arith.constant 0 : index
      %c36 = arith.constant 36 : index
      %199 = vector.load %arg2[%c0_83, %c0_84, %c36] : memref<1x16x384xbf16, #tpu.memory_space<vmem>>, vector<1x16x288xbf16>
      %200 = vector.shape_cast %199 : vector<1x16x288xbf16> to vector<16x288xbf16>
      %c96_85 = arith.constant 96 : index
      %c0_86 = arith.constant 0 : index
      %201 = vector.load %arg6[%c96_85, %c0_86] : memref<144x288xbf16, #tpu.memory_space<vmem>>, vector<16x288xbf16>
      tpu.vector_store %arg6[%c96_85, %c0_86], %200 {strides = array<i32>} : memref<144x288xbf16, #tpu.memory_space<vmem>>, vector<16x288xbf16>,
      %c0_87 = arith.constant 0 : index
      %c0_88 = arith.constant 0 : index
      %c37 = arith.constant 37 : index
      %202 = vector.load %arg2[%c0_87, %c0_88, %c37] : memref<1x16x384xbf16, #tpu.memory_space<vmem>>, vector<1x16x288xbf16>
      %203 = vector.shape_cast %202 : vector<1x16x288xbf16> to vector<16x288xbf16>
      %c112_89 = arith.constant 112 : index
      %c0_90 = arith.constant 0 : index
      %204 = vector.load %arg6[%c112_89, %c0_90] : memref<144x288xbf16, #tpu.memory_space<vmem>>, vector<16x288xbf16>
      tpu.vector_store %arg6[%c112_89, %c0_90], %203 {strides = array<i32>} : memref<144x288xbf16, #tpu.memory_space<vmem>>, vector<16x288xbf16>,
      %c0_91 = arith.constant 0 : index
      %c0_92 = arith.constant 0 : index
      %c38 = arith.constant 38 : index
      %205 = vector.load %arg2[%c0_91, %c0_92, %c38] : memref<1x16x384xbf16, #tpu.memory_space<vmem>>, vector<1x16x288xbf16>
      %206 = vector.shape_cast %205 : vector<1x16x288xbf16> to vector<16x288xbf16>
      %c128_93 = arith.constant 128 : index
      %c0_94 = arith.constant 0 : index
      %207 = vector.load %arg6[%c128_93, %c0_94] : memref<144x288xbf16, #tpu.memory_space<vmem>>, vector<16x288xbf16>
      tpu.vector_store %arg6[%c128_93, %c0_94], %206 {strides = array<i32>} : memref<144x288xbf16, #tpu.memory_space<vmem>>, vector<16x288xbf16>,
    } else {
    }
    %c0 = arith.constant 0 : index
    %c0_1 = arith.constant 0 : index
    %3 = vector.load %arg3[%c0, %c0_1] : memref<16x144xbf16, #tpu.memory_space<vmem>>, vector<16x144xbf16>
    %c0_2 = arith.constant 0 : index
    %c0_3 = arith.constant 0 : index
    %4 = vector.load %arg6[%c0_2, %c0_3] : memref<144x288xbf16, #tpu.memory_space<vmem>>, vector<144x288xbf16>
    %cst = arith.constant dense<0.000000e+00> : vector<16x288xf32>
    %5 = tpu.matmul %3, %4, %cst {dimension_numbers = #tpu.dot_dimension_numbers<[1], [0], [0], [1], [0, 0, 1, 1], [], []>} : vector<16x144xbf16>, vector<144x288xbf16>, vector<16x288xf32> -> vector<16x288xf32>
    %6 = vector.extract_strided_slice %5 {offsets = [0, 0], sizes = [16, 16], strides = [1, 1]} : vector<16x288xf32> to vector<16x16xf32>
    %c0_4 = arith.constant 0 : index
    %c0_5 = arith.constant 0 : index
    %7 = vector.load %arg7[%c0_4, %c0_5] : memref<16x256xf32, #tpu.memory_space<vmem>>, vector<16x16xf32>
    tpu.vector_store %arg7[%c0_4, %c0_5], %6 {strides = array<i32>} : memref<16x256xf32, #tpu.memory_space<vmem>>, vector<16x16xf32>,
    %8 = vector.extract_strided_slice %5 {offsets = [0, 18], sizes = [16, 16], strides = [1, 1]} : vector<16x288xf32> to vector<16x16xf32>
    %c0_6 = arith.constant 0 : index
    %c16 = arith.constant 16 : index
    %9 = vector.load %arg7[%c0_6, %c16] : memref<16x256xf32, #tpu.memory_space<vmem>>, vector<16x16xf32>
    tpu.vector_store %arg7[%c0_6, %c16], %8 {strides = array<i32>} : memref<16x256xf32, #tpu.memory_space<vmem>>, vector<16x16xf32>,
    %10 = vector.extract_strided_slice %5 {offsets = [0, 36], sizes = [16, 16], strides = [1, 1]} : vector<16x288xf32> to vector<16x16xf32>
    %c0_7 = arith.constant 0 : index
    %c32 = arith.constant 32 : index
    %11 = vector.load %arg7[%c0_7, %c32] : memref<16x256xf32, #tpu.memory_space<vmem>>, vector<16x16xf32>
    tpu.vector_store %arg7[%c0_7, %c32], %10 {strides = array<i32>} : memref<16x256xf32, #tpu.memory_space<vmem>>, vector<16x16xf32>,
    %12 = vector.extract_strided_slice %5 {offsets = [0, 54], sizes = [16, 16], strides = [1, 1]} : vector<16x288xf32> to vector<16x16xf32>
    %c0_8 = arith.constant 0 : index
    %c48 = arith.constant 48 : index
    %13 = vector.load %arg7[%c0_8, %c48] : memref<16x256xf32, #tpu.memory_space<vmem>>, vector<16x16xf32>
    tpu.vector_store %arg7[%c0_8, %c48], %12 {strides = array<i32>} : memref<16x256xf32, #tpu.memory_space<vmem>>, vector<16x16xf32>,
    %14 = vector.extract_strided_slice %5 {offsets = [0, 72], sizes = [16, 16], strides = [1, 1]} : vector<16x288xf32> to vector<16x16xf32>
    %c0_9 = arith.constant 0 : index
    %c64 = arith.constant 64 : index
    %15 = vector.load %arg7[%c0_9, %c64] : memref<16x256xf32, #tpu.memory_space<vmem>>, vector<16x16xf32>
    tpu.vector_store %arg7[%c0_9, %c64], %14 {strides = array<i32>} : memref<16x256xf32, #tpu.memory_space<vmem>>, vector<16x16xf32>,
    %16 = vector.extract_strided_slice %5 {offsets = [0, 90], sizes = [16, 16], strides = [1, 1]} : vector<16x288xf32> to vector<16x16xf32>
    %c0_10 = arith.constant 0 : index
    %c80 = arith.constant 80 : index
    %17 = vector.load %arg7[%c0_10, %c80] : memref<16x256xf32, #tpu.memory_space<vmem>>, vector<16x16xf32>
    tpu.vector_store %arg7[%c0_10, %c80], %16 {strides = array<i32>} : memref<16x256xf32, #tpu.memory_space<vmem>>, vector<16x16xf32>,
    %18 = vector.extract_strided_slice %5 {offsets = [0, 108], sizes = [16, 16], strides = [1, 1]} : vector<16x288xf32> to vector<16x16xf32>
    %c0_11 = arith.constant 0 : index
    %c96 = arith.constant 96 : index
    %19 = vector.load %arg7[%c0_11, %c96] : memref<16x256xf32, #tpu.memory_space<vmem>>, vector<16x16xf32>
    tpu.vector_store %arg7[%c0_11, %c96], %18 {strides = array<i32>} : memref<16x256xf32, #tpu.memory_space<vmem>>, vector<16x16xf32>,
    %20 = vector.extract_strided_slice %5 {offsets = [0, 126], sizes = [16, 16], strides = [1, 1]} : vector<16x288xf32> to vector<16x16xf32>
    %c0_12 = arith.constant 0 : index
    %c112 = arith.constant 112 : index
    %21 = vector.load %arg7[%c0_12, %c112] : memref<16x256xf32, #tpu.memory_space<vmem>>, vector<16x16xf32>
    tpu.vector_store %arg7[%c0_12, %c112], %20 {strides = array<i32>} : memref<16x256xf32, #tpu.memory_space<vmem>>, vector<16x16xf32>,
    %22 = vector.extract_strided_slice %5 {offsets = [0, 144], sizes = [16, 16], strides = [1, 1]} : vector<16x288xf32> to vector<16x16xf32>
    %c0_13 = arith.constant 0 : index
    %c128 = arith.constant 128 : index
    %23 = vector.load %arg7[%c0_13, %c128] : memref<16x256xf32, #tpu.memory_space<vmem>>, vector<16x16xf32>
    tpu.vector_store %arg7[%c0_13, %c128], %22 {strides = array<i32>} : memref<16x256xf32, #tpu.memory_space<vmem>>, vector<16x16xf32>,
    %24 = vector.extract_strided_slice %5 {offsets = [0, 162], sizes = [16, 16], strides = [1, 1]} : vector<16x288xf32> to vector<16x16xf32>
    %c0_14 = arith.constant 0 : index
    %c144 = arith.constant 144 : index
    %25 = vector.load %arg7[%c0_14, %c144] : memref<16x256xf32, #tpu.memory_space<vmem>>, vector<16x16xf32>
    tpu.vector_store %arg7[%c0_14, %c144], %24 {strides = array<i32>} : memref<16x256xf32, #tpu.memory_space<vmem>>, vector<16x16xf32>,
    %26 = vector.extract_strided_slice %5 {offsets = [0, 180], sizes = [16, 16], strides = [1, 1]} : vector<16x288xf32> to vector<16x16xf32>
    %c0_15 = arith.constant 0 : index
    %c160 = arith.constant 160 : index
    %27 = vector.load %arg7[%c0_15, %c160] : memref<16x256xf32, #tpu.memory_space<vmem>>, vector<16x16xf32>
    tpu.vector_store %arg7[%c0_15, %c160], %26 {strides = array<i32>} : memref<16x256xf32, #tpu.memory_space<vmem>>, vector<16x16xf32>,
    %28 = vector.extract_strided_slice %5 {offsets = [0, 198], sizes = [16, 16], strides = [1, 1]} : vector<16x288xf32> to vector<16x16xf32>
    %c0_16 = arith.constant 0 : index
    %c176 = arith.constant 176 : index
    %29 = vector.load %arg7[%c0_16, %c176] : memref<16x256xf32, #tpu.memory_space<vmem>>, vector<16x16xf32>
    tpu.vector_store %arg7[%c0_16, %c176], %28 {strides = array<i32>} : memref<16x256xf32, #tpu.memory_space<vmem>>, vector<16x16xf32>,
    %30 = vector.extract_strided_slice %5 {offsets = [0, 216], sizes = [16, 16], strides = [1, 1]} : vector<16x288xf32> to vector<16x16xf32>
    %c0_17 = arith.constant 0 : index
    %c192 = arith.constant 192 : index
    %31 = vector.load %arg7[%c0_17, %c192] : memref<16x256xf32, #tpu.memory_space<vmem>>, vector<16x16xf32>
    tpu.vector_store %arg7[%c0_17, %c192], %30 {strides = array<i32>} : memref<16x256xf32, #tpu.memory_space<vmem>>, vector<16x16xf32>,
    %32 = vector.extract_strided_slice %5 {offsets = [0, 234], sizes = [16, 16], strides = [1, 1]} : vector<16x288xf32> to vector<16x16xf32>
    %c0_18 = arith.constant 0 : index
    %c208 = arith.constant 208 : index
    %33 = vector.load %arg7[%c0_18, %c208] : memref<16x256xf32, #tpu.memory_space<vmem>>, vector<16x16xf32>
    tpu.vector_store %arg7[%c0_18, %c208], %32 {strides = array<i32>} : memref<16x256xf32, #tpu.memory_space<vmem>>, vector<16x16xf32>,
    %34 = vector.extract_strided_slice %5 {offsets = [0, 252], sizes = [16, 16], strides = [1, 1]} : vector<16x288xf32> to vector<16x16xf32>
    %c0_19 = arith.constant 0 : index
    %c224 = arith.constant 224 : index
    %35 = vector.load %arg7[%c0_19, %c224] : memref<16x256xf32, #tpu.memory_space<vmem>>, vector<16x16xf32>
    tpu.vector_store %arg7[%c0_19, %c224], %34 {strides = array<i32>} : memref<16x256xf32, #tpu.memory_space<vmem>>, vector<16x16xf32>,
    %36 = vector.extract_strided_slice %5 {offsets = [0, 270], sizes = [16, 16], strides = [1, 1]} : vector<16x288xf32> to vector<16x16xf32>
    %c0_20 = arith.constant 0 : index
    %c240 = arith.constant 240 : index
    %37 = vector.load %arg7[%c0_20, %c240] : memref<16x256xf32, #tpu.memory_space<vmem>>, vector<16x16xf32>
    tpu.vector_store %arg7[%c0_20, %c240], %36 {strides = array<i32>} : memref<16x256xf32, #tpu.memory_space<vmem>>, vector<16x16xf32>,
    %c0_21 = arith.constant 0 : index
    %c0_22 = arith.constant 0 : index
    %38 = vector.load %arg7[%c0_21, %c0_22] : memref<16x256xf32, #tpu.memory_space<vmem>>, vector<16x256xf32>
    %cst_23 = arith.constant dense<0.000000e+00> : vector<16xf32>
    %39 = vector.multi_reduction <add>, %38, %cst_23 [1] : vector<16x256xf32> to vector<16xf32>
    %40 = vector.shape_cast %39 : vector<16xf32> to vector<16x1xf32>
    %41 = arith.mulf %38, %38 : vector<16x256xf32>
    %cst_24 = arith.constant dense<0.000000e+00> : vector<16xf32>
    %42 = vector.multi_reduction <add>, %41, %cst_24 [1] : vector<16x256xf32> to vector<16xf32>
    %43 = vector.shape_cast %42 : vector<16xf32> to vector<16x1xf32>
    %c0_25 = arith.constant 0 : index
    %c0_26 = arith.constant 0 : index
    %44 = vector.load %arg4[%c0_25, %c0_26] : memref<16x3xf32, #tpu.memory_space<vmem>>, vector<16x1xf32>
    %c0_27 = arith.constant 0 : index
    %c1 = arith.constant 1 : index
    %45 = vector.load %arg4[%c0_27, %c1] : memref<16x3xf32, #tpu.memory_space<vmem>>, vector<16x1xf32>
    %c0_28 = arith.constant 0 : index
    %c2 = arith.constant 2 : index
    %46 = vector.load %arg4[%c0_28, %c2] : memref<16x3xf32, #tpu.memory_space<vmem>>, vector<16x1xf32>
    %cst_29 = arith.constant 2.560000e+02 : f32
    %47 = vector.broadcast %cst_29 : f32 to vector<16x1xf32>
    %48 = arith.mulf %47, %44 : vector<16x1xf32>
    %49 = arith.addf %40, %48 : vector<16x1xf32>
    %cst_30 = arith.constant 2.000000e+00 : f32
    %50 = vector.broadcast %cst_30 : f32 to vector<16x1xf32>
    %51 = arith.mulf %50, %44 : vector<16x1xf32>
    %52 = arith.mulf %51, %40 : vector<16x1xf32>
    %53 = arith.addf %43, %52 : vector<16x1xf32>
    %cst_31 = arith.constant 2.560000e+02 : f32
    %54 = vector.broadcast %cst_31 : f32 to vector<16x1xf32>
    %55 = arith.mulf %54, %44 : vector<16x1xf32>
    %56 = arith.mulf %55, %44 : vector<16x1xf32>
    %57 = arith.addf %53, %56 : vector<16x1xf32>
    %58 = tpu.iota {dimensions = array<i32: 0>} : vector<16x1xi32>
    %59 = tpu.iota {dimensions = array<i32: 1>} : vector<1x16xi32>
    %cst_32 = arith.constant 0.000000e+00 : f32
    %60 = vector.broadcast %cst_32 : f32 to vector<16x1xf32>
    %cst_33 = arith.constant 0.000000e+00 : f32
    %61 = vector.broadcast %cst_33 : f32 to vector<1x16xf32>
    %c2_i32 = arith.constant 2 : i32
    %62 = vector.broadcast %c2_i32 : i32 to vector<16x1xi32>
    %63 = arith.cmpi sge, %58, %62 : vector<16x1xi32>
    %64 = arith.extui %63 : vector<16x1xi1> to vector<16x1xi32>
    %65 = arith.sitofp %64 : vector<16x1xi32> to vector<16x1xf32>
    %66 = arith.addf %60, %65 : vector<16x1xf32>
    %c2_i32_34 = arith.constant 2 : i32
    %67 = vector.broadcast %c2_i32_34 : i32 to vector<1x16xi32>
    %68 = arith.cmpi sge, %59, %67 : vector<1x16xi32>
    %69 = arith.extui %68 : vector<1x16xi1> to vector<1x16xi32>
    %70 = arith.sitofp %69 : vector<1x16xi32> to vector<1x16xf32>
    %71 = arith.addf %61, %70 : vector<1x16xf32>
    %c4_i32 = arith.constant 4 : i32
    %72 = vector.broadcast %c4_i32 : i32 to vector<16x1xi32>
    %73 = arith.cmpi sge, %58, %72 : vector<16x1xi32>
    %74 = arith.extui %73 : vector<16x1xi1> to vector<16x1xi32>
    %75 = arith.sitofp %74 : vector<16x1xi32> to vector<16x1xf32>
    %76 = arith.addf %66, %75 : vector<16x1xf32>
    %c4_i32_35 = arith.constant 4 : i32
    %77 = vector.broadcast %c4_i32_35 : i32 to vector<1x16xi32>
    %78 = arith.cmpi sge, %59, %77 : vector<1x16xi32>
    %79 = arith.extui %78 : vector<1x16xi1> to vector<1x16xi32>
    %80 = arith.sitofp %79 : vector<1x16xi32> to vector<1x16xf32>
    %81 = arith.addf %71, %80 : vector<1x16xf32>
    %c6_i32 = arith.constant 6 : i32
    %82 = vector.broadcast %c6_i32 : i32 to vector<16x1xi32>
    %83 = arith.cmpi sge, %58, %82 : vector<16x1xi32>
    %84 = arith.extui %83 : vector<16x1xi1> to vector<16x1xi32>
    %85 = arith.sitofp %84 : vector<16x1xi32> to vector<16x1xf32>
    %86 = arith.addf %76, %85 : vector<16x1xf32>
    %c6_i32_36 = arith.constant 6 : i32
    %87 = vector.broadcast %c6_i32_36 : i32 to vector<1x16xi32>
    %88 = arith.cmpi sge, %59, %87 : vector<1x16xi32>
    %89 = arith.extui %88 : vector<1x16xi1> to vector<1x16xi32>
    %90 = arith.sitofp %89 : vector<1x16xi32> to vector<1x16xf32>
    %91 = arith.addf %81, %90 : vector<1x16xf32>
    %c8_i32 = arith.constant 8 : i32
    %92 = vector.broadcast %c8_i32 : i32 to vector<16x1xi32>
    %93 = arith.cmpi sge, %58, %92 : vector<16x1xi32>
    %94 = arith.extui %93 : vector<16x1xi1> to vector<16x1xi32>
    %95 = arith.sitofp %94 : vector<16x1xi32> to vector<16x1xf32>
    %96 = arith.addf %86, %95 : vector<16x1xf32>
    %c8_i32_37 = arith.constant 8 : i32
    %97 = vector.broadcast %c8_i32_37 : i32 to vector<1x16xi32>
    %98 = arith.cmpi sge, %59, %97 : vector<1x16xi32>
    %99 = arith.extui %98 : vector<1x16xi1> to vector<1x16xi32>
    %100 = arith.sitofp %99 : vector<1x16xi32> to vector<1x16xf32>
    %101 = arith.addf %91, %100 : vector<1x16xf32>
    %c10_i32 = arith.constant 10 : i32
    %102 = vector.broadcast %c10_i32 : i32 to vector<16x1xi32>
    %103 = arith.cmpi sge, %58, %102 : vector<16x1xi32>
    %104 = arith.extui %103 : vector<16x1xi1> to vector<16x1xi32>
    %105 = arith.sitofp %104 : vector<16x1xi32> to vector<16x1xf32>
    %106 = arith.addf %96, %105 : vector<16x1xf32>
    %c10_i32_38 = arith.constant 10 : i32
    %107 = vector.broadcast %c10_i32_38 : i32 to vector<1x16xi32>
    %108 = arith.cmpi sge, %59, %107 : vector<1x16xi32>
    %109 = arith.extui %108 : vector<1x16xi1> to vector<1x16xi32>
    %110 = arith.sitofp %109 : vector<1x16xi32> to vector<1x16xf32>
    %111 = arith.addf %101, %110 : vector<1x16xf32>
    %c12_i32 = arith.constant 12 : i32
    %112 = vector.broadcast %c12_i32 : i32 to vector<16x1xi32>
    %113 = arith.cmpi sge, %58, %112 : vector<16x1xi32>
    %114 = arith.extui %113 : vector<16x1xi1> to vector<16x1xi32>
    %115 = arith.sitofp %114 : vector<16x1xi32> to vector<16x1xf32>
    %116 = arith.addf %106, %115 : vector<16x1xf32>
    %c12_i32_39 = arith.constant 12 : i32
    %117 = vector.broadcast %c12_i32_39 : i32 to vector<1x16xi32>
    %118 = arith.cmpi sge, %59, %117 : vector<1x16xi32>
    %119 = arith.extui %118 : vector<1x16xi1> to vector<1x16xi32>
    %120 = arith.sitofp %119 : vector<1x16xi32> to vector<1x16xf32>
    %121 = arith.addf %111, %120 : vector<1x16xf32>
    %c14_i32 = arith.constant 14 : i32
    %122 = vector.broadcast %c14_i32 : i32 to vector<16x1xi32>
    %123 = arith.cmpi sge, %58, %122 : vector<16x1xi32>
    %124 = arith.extui %123 : vector<16x1xi1> to vector<16x1xi32>
    %125 = arith.sitofp %124 : vector<16x1xi32> to vector<16x1xf32>
    %126 = arith.addf %116, %125 : vector<16x1xf32>
    %c14_i32_40 = arith.constant 14 : i32
    %127 = vector.broadcast %c14_i32_40 : i32 to vector<1x16xi32>
    %128 = arith.cmpi sge, %59, %127 : vector<1x16xi32>
    %129 = arith.extui %128 : vector<1x16xi1> to vector<1x16xi32>
    %130 = arith.sitofp %129 : vector<1x16xi32> to vector<1x16xf32>
    %131 = arith.addf %121, %130 : vector<1x16xf32>
    %132 = vector.broadcast %126 : vector<16x1xf32> to vector<16x16xf32>
    %133 = vector.broadcast %131 : vector<1x16xf32> to vector<16x16xf32>
    %134 = arith.cmpf oeq, %132, %133 : vector<16x16xf32>
    %135 = arith.extui %134 : vector<16x16xi1> to vector<16x16xi32>
    %136 = arith.sitofp %135 : vector<16x16xi32> to vector<16x16xf32>
    %cst_41 = arith.constant dense<0.000000e+00> : vector<16x1xf32>
    %137 = tpu.matmul %136, %49, %cst_41 {dimension_numbers = #tpu.dot_dimension_numbers<[1], [0], [0], [1], [0, 0, 1, 1], [], []>} : vector<16x16xf32>, vector<16x1xf32>, vector<16x1xf32> -> vector<16x1xf32>
    %cst_42 = arith.constant 0.001953125 : f32
    %138 = vector.broadcast %cst_42 : f32 to vector<16x1xf32>
    %139 = arith.mulf %137, %138 : vector<16x1xf32>
    %cst_43 = arith.constant dense<0.000000e+00> : vector<16x1xf32>
    %140 = tpu.matmul %136, %57, %cst_43 {dimension_numbers = #tpu.dot_dimension_numbers<[1], [0], [0], [1], [0, 0, 1, 1], [], []>} : vector<16x16xf32>, vector<16x1xf32>, vector<16x1xf32> -> vector<16x1xf32>
    %cst_44 = arith.constant 0.001953125 : f32
    %141 = vector.broadcast %cst_44 : f32 to vector<16x1xf32>
    %142 = arith.mulf %140, %141 : vector<16x1xf32>
    %143 = arith.mulf %139, %139 : vector<16x1xf32>
    %144 = arith.subf %142, %143 : vector<16x1xf32>
    %cst_45 = arith.constant 0.000000e+00 : f32
    %145 = vector.broadcast %cst_45 : f32 to vector<16x1xf32>
    %146 = arith.maximumf %144, %145 : vector<16x1xf32>
    %cst_46 = arith.constant 9.99999974E-6 : f32
    %147 = vector.broadcast %cst_46 : f32 to vector<16x1xf32>
    %148 = arith.addf %146, %147 : vector<16x1xf32>
    %149 = math.rsqrt %148 : vector<16x1xf32>
    %150 = arith.mulf %149, %45 : vector<16x1xf32>
    %151 = arith.subf %44, %139 : vector<16x1xf32>
    %152 = arith.mulf %151, %150 : vector<16x1xf32>
    %153 = arith.addf %46, %152 : vector<16x1xf32>
    %154 = vector.broadcast %150 : vector<16x1xf32> to vector<16x256xf32>
    %155 = arith.mulf %38, %154 : vector<16x256xf32>
    %156 = vector.broadcast %153 : vector<16x1xf32> to vector<16x256xf32>
    %157 = arith.addf %155, %156 : vector<16x256xf32>
    %158 = math.absf %157 : vector<16x256xf32>
    %cst_47 = arith.constant 0.000000e+00 : f32
    %159 = vector.broadcast %cst_47 : f32 to vector<16x256xf32>
    %160 = arith.subf %159, %158 : vector<16x256xf32>
    %161 = math.exp %160 : vector<16x256xf32>
    %162 = arith.mulf %161, %161 : vector<16x256xf32>
    %cst_48 = arith.constant 0.000000e+00 : f32
    %163 = vector.broadcast %cst_48 : f32 to vector<16x256xf32>
    %164 = arith.cmpf oge, %157, %163 : vector<16x256xf32>
    %cst_49 = arith.constant 1.000000e+00 : f32
    %165 = vector.broadcast %cst_49 : f32 to vector<16x256xf32>
    %166 = arith.select %164, %165, %162 : vector<16x256xi1>, vector<16x256xf32>
    %cst_50 = arith.constant 2.000000e+00 : f32
    %167 = vector.broadcast %cst_50 : f32 to vector<16x256xf32>
    %168 = arith.mulf %167, %161 : vector<16x256xf32>
    %169 = arith.addf %166, %168 : vector<16x256xf32>
    %cst_51 = arith.constant 2.000000e+00 : f32
    %170 = vector.broadcast %cst_51 : f32 to vector<16x256xf32>
    %171 = arith.mulf %170, %162 : vector<16x256xf32>
    %cst_52 = arith.constant 2.000000e+00 : f32
    %172 = vector.broadcast %cst_52 : f32 to vector<16x256xf32>
    %173 = arith.select %164, %171, %172 : vector<16x256xi1>, vector<16x256xf32>
    %174 = arith.addf %169, %173 : vector<16x256xf32>
    %175 = arith.mulf %157, %169 : vector<16x256xf32>
    %176 = tpu.reciprocal %174 {approx = true} : vector<16x256xf32> -> vector<16x256xf32>
    %177 = arith.mulf %175, %176 : vector<16x256xf32>
    %c0_53 = arith.constant 0 : index
    %c0_54 = arith.constant 0 : index
    %c0_55 = arith.constant 0 : index
    %178 = vector.load %arg5[%c0_53, %c0_54, %c0_55] : memref<1x16x256xf32, #tpu.memory_space<vmem>>, vector<1x16x256xf32>
    %179 = vector.shape_cast %178 : vector<1x16x256xf32> to vector<16x256xf32>
    %180 = vector.shape_cast %177 : vector<16x256xf32> to vector<1x16x256xf32>
    tpu.vector_store %arg5[%c0_53, %c0_54, %c0_55], %180 {strides = array<i32>} : memref<1x16x256xf32, #tpu.memory_space<vmem>>, vector<1x16x256xf32>,
    return
  }
  func.func @transform_0(%arg0: i32, %arg1: i32) -> (i32, i32, i32) {
    %c0_i32 = arith.constant 0 : i32
    %c0_i32_0 = arith.constant 0 : i32
    %c0_i32_1 = arith.constant 0 : i32
    return %arg0, %c0_i32, %c0_i32_0 : i32, i32, i32
  }
  func.func @transform_1(%arg0: i32, %arg1: i32) -> (i32, i32) {
    %c0_i32 = arith.constant 0 : i32
    %c0_i32_0 = arith.constant 0 : i32
    return %arg1, %c0_i32 : i32, i32
  }
  func.func @transform_2(%arg0: i32, %arg1: i32) -> (i32, i32) {
    %c0_i32 = arith.constant 0 : i32
    %c0_i32_0 = arith.constant 0 : i32
    return %arg1, %c0_i32 : i32, i32
  }
  func.func @transform_3(%arg0: i32, %arg1: i32) -> (i32, i32, i32) {
    %c0_i32 = arith.constant 0 : i32
    %c0_i32_0 = arith.constant 0 : i32
    return %arg0, %arg1, %c0_i32 : i32, i32, i32
  }
}

</mosaic_0001>

<llo_original>
// kernel: tpu_custom_call.1
$region0: #{tpu_custom_call.1}
  #allocation0 [shape = 'u32[]', space=smem, size = 0x4, offset = 0x4, fixed_abs, tag = 'smem constant byte address 0x4 - core index']
  #allocation1 [shape = 'u32[144,128]{1,0:T(1,128)}', space=vmem, size = 0x12000, scoped, tag = 'internal scratch']
  #allocation2 [shape = 'bf16[144,288]{1,0:T(16,128)(2,1)}', space=vmem, size = 0x1b000, scoped, tag = 'scratch operand']
  #allocation3 [shape = 'f32[16,256]{1,0:T(8,128)}', space=vmem, size = 0x4000, scoped, tag = 'scratch operand']
  %s0 = inlined_call_operand.hbm [shape: bf16[2,16,384], index: 0, kind: input, shape index: {}]
  %s1 = inlined_call_operand.hbm [shape: bf16[16,144], index: 1, kind: input, shape index: {}]
  %s2 = inlined_call_operand.hbm [shape: f32[16,3], index: 2, kind: input, shape index: {}]
  %s3 = inlined_call_operand.hbm [shape: f32[2,16,256], index: 3, kind: output, shape index: {}]
  %s4 = sld [smem:[#allocation0]]
  $region61: #{tpu_custom_call.1} parent=0
    _
  %s6 = ssub.s32 1, %s4
  %s7 = scalar_select 0, %s6, %s4
  $region1: #{tpu_custom_call.1} parent=0
    #allocation4 [shape = 'u8[24576]{0}', space=vmem, size = 0x6000, scoped, tag = 'input window, operand 0']
    #allocation5 [shape = 's32[2]{0}', space=sflag, size = 0x8, scoped, tag = 'scoped memory for tpu_custom_call.1']
    #allocation6 [shape = 's32[2]{0}', space=sflag, size = 0x8, scoped, tag = 'scoped memory for tpu_custom_call.1']
    #allocation7 [shape = 'u8[8192]{0}', space=vmem, size = 0x2000, scoped, tag = 'input window, operand 1, single buffered']
    #allocation8 [shape = 's32[1]{0}', space=sflag, size = 0x4, scoped, tag = 'scoped memory for tpu_custom_call.1']
    #allocation9 [shape = 'u8[8192]{0}', space=vmem, size = 0x2000, scoped, tag = 'input window, operand 2, single buffered']
    #allocation10 [shape = 'u8[32768]{0}', space=vmem, size = 0x8000, scoped, tag = 'output window, operand 0']
    %8 = vsyncpa [#allocation5], 0
    %s9 = scalar_lea.sflag [#allocation5], 1
    %10 = vsyncpa %s9, 0
    %11 = vsyncpa [#allocation8], 0
    %12 = vsyncpa [#allocation6], 0
    %s13 = scalar_lea.sflag [#allocation6], 1
    %14 = vsyncpa %s13, 0
    loop: start=0, step=1, limit=4
    $region2: #{tpu_custom_call.1} parent=1 // loop_pre_header
      _
    $region3: #{tpu_custom_call.1} parent=1 // loop_header
      %s16 = sphi 0, %s20
      %p17 = scmp.ge.s32.totalorder %s16, 4
      %s23 = sphi 0, %s35
      %s24 = sphi 0, %s31
      %s25 = sphi 0, %s23
      %s26 = sphi 0, %s24
      %s27 = sphi 0, %s25
      %s28 = sphi 0, %s26
      %s38 = sphi 0, %s40
      %s41 = sphi 0, %s38
      %s42 = sphi 0, %s41
      %s58 = sphi 0, %s42
      %s64 = sphi 0, %s66
      %s67 = sphi 0, %s64
      %s68 = sphi 0, %s67
      %s84 = sphi 0, %s68
      %s90 = sphi 0, %s92
      %s93 = sphi 0, %s90
      %s94 = sphi 0, %s93
      %s110 = sphi 0, %s94
      %s118 = sphi 0, %s120
      %s121 = sphi 0, %s118
      %s122 = sphi 0, %s121
      %s138 = sphi 0, %s122
    $region4: #{tpu_custom_call.1} parent=1 // loop_header_branch
      %19 = sbr.rel (%p17) target = $region8
    $region5: #{tpu_custom_call.1} parent=1 // loop_body
      %s21 = ssub.s32 %s16, 1
      %s22 = ssub.s32 %s16, 2
      %s29 = sadd.s32 1, %s24
      %p30 = scmp.ge.s32.totalorder %s29, 1
      %s31 = scalar_select %p30, 0, %s29
      %s32 = sadd.s32 1, %s23
      %s33 = scalar_select %p30, %s32, %s23
      %p34 = scmp.ge.s32.totalorder %s33, 2
      %s35 = scalar_select %p34, 0, %s33
      %s36 = ssub.s32 %s23, %s35
      %p37 = scmp.eq.s32.totalorder %s36, 0
      %s39 = sadd.s32 %s38, 1
      %s40 = scalar_select %p37, %s38, %s39
      %p43 = pneg %p37
      %p44 = scmp.eq.s32.totalorder %s16, 1
      %p45 = por %p43, %p44
      %p46 = scmp.ne.s32.totalorder %s38, %s41
      %p47 = scmp.eq.s32.totalorder %s16, 0
      %p48 = por %p46, %p47
      %p49 = scmp.ne.s32.totalorder %s38, %s41
      %p50 = scmp.eq.s32.totalorder %s21, 1
      %p51 = por %p49, %p50
      %p52 = scmp.ne.s32.totalorder %s41, %s42
      %p53 = scmp.eq.s32.totalorder %s21, 0
      %p54 = por %p52, %p53
      %p55 = scmp.ne.s32.totalorder %s41, %s42
      %p56 = scmp.eq.s32.totalorder %s22, 1
      %p57 = por %p55, %p56
      %p59 = scmp.ne.s32.totalorder %s42, %s58
      %p60 = scmp.eq.s32.totalorder %s22, 0
      %p61 = por %p59, %p60
      %s62 = ssub.s32 %s24, %s31
      %p63 = scmp.eq.s32.totalorder %s62, 0
      %s65 = sadd.s32 %s64, 1
      %s66 = scalar_select %p63, %s64, %s65
      %p69 = pneg %p63
      %p70 = scmp.eq.s32.totalorder %s16, 1
      %p71 = por %p69, %p70
      %p72 = scmp.ne.s32.totalorder %s64, %s67
      %p73 = scmp.eq.s32.totalorder %s16, 0
      %p74 = por %p72, %p73
      %p75 = scmp.ne.s32.totalorder %s64, %s67
      %p76 = scmp.eq.s32.totalorder %s21, 1
      %p77 = por %p75, %p76
      %p78 = scmp.ne.s32.totalorder %s67, %s68
      %p79 = scmp.eq.s32.totalorder %s21, 0
      %p80 = por %p78, %p79
      %p81 = scmp.ne.s32.totalorder %s67, %s68
      %p82 = scmp.eq.s32.totalorder %s22, 1
      %p83 = por %p81, %p82
      %p85 = scmp.ne.s32.totalorder %s68, %s84
      %p86 = scmp.eq.s32.totalorder %s22, 0
      %p87 = por %p85, %p86
      %s88 = ssub.s32 %s24, %s31
      %p89 = scmp.eq.s32.totalorder %s88, 0
      %s91 = sadd.s32 %s90, 1
      %s92 = scalar_select %p89, %s90, %s91
      %p95 = pneg %p89
      %p96 = scmp.eq.s32.totalorder %s16, 1
      %p97 = por %p95, %p96
      %p98 = scmp.ne.s32.totalorder %s90, %s93
      %p99 = scmp.eq.s32.totalorder %s16, 0
      %p100 = por %p98, %p99
      %p101 = scmp.ne.s32.totalorder %s90, %s93
      %p102 = scmp.eq.s32.totalorder %s21, 1
      %p103 = por %p101, %p102
      %p104 = scmp.ne.s32.totalorder %s93, %s94
      %p105 = scmp.eq.s32.totalorder %s21, 0
      %p106 = por %p104, %p105
      %p107 = scmp.ne.s32.totalorder %s93, %s94
      %p108 = scmp.eq.s32.totalorder %s22, 1
      %p109 = por %p107, %p108
      %p111 = scmp.ne.s32.totalorder %s94, %s110
      %p112 = scmp.eq.s32.totalorder %s22, 0
      %p113 = por %p111, %p112
      %s114 = ssub.s32 %s23, %s35
      %s115 = ssub.s32 %s24, %s31
      %s116 = sor.u32 %s114, %s115
      %p117 = scmp.eq.s32.totalorder %s116, 0
      %s119 = sadd.s32 %s118, 1
      %s120 = scalar_select %p117, %s118, %s119
      %p123 = pneg %p117
      %p124 = scmp.eq.s32.totalorder %s16, 1
      %p125 = por %p123, %p124
      %p126 = scmp.ne.s32.totalorder %s118, %s121
      %p127 = scmp.eq.s32.totalorder %s16, 0
      %p128 = por %p126, %p127
      %p129 = scmp.ne.s32.totalorder %s118, %s121
      %p130 = scmp.eq.s32.totalorder %s21, 1
      %p131 = por %p129, %p130
      %p132 = scmp.ne.s32.totalorder %s121, %s122
      %p133 = scmp.eq.s32.totalorder %s21, 0
      %p134 = por %p132, %p133
      %p135 = scmp.ne.s32.totalorder %s121, %s122
      %p136 = scmp.eq.s32.totalorder %s22, 1
      %p137 = por %p135, %p136
      %p139 = scmp.ne.s32.totalorder %s122, %s138
      %p140 = scmp.eq.s32.totalorder %s22, 0
      %p141 = por %p139, %p140
      %p142 = scmp.le.s32.totalorder 1, %s16
      %p143 = scmp.lt.s32.totalorder %s16, 3
      %p144 = pnand %p142, %p143
      %p145 = pneg %p144
      // Predicated region
      $region9: #{tpu_custom_call.1} parent=5 // pred_check
        _
      $region10: #{tpu_custom_call.1} parent=5 // pred_check_branch
        %147 = sbr.rel (%p144) target = $region12
      $region11: #{tpu_custom_call.1} parent=5 // pred_region
        %s148 = ssub.s32 %s16, 1
        // Predicated region
        $region13: #{tpu_custom_call.1} parent=11 // pred_check
          %p149 = pneg %p80
        $region14: #{tpu_custom_call.1} parent=11 // pred_check_branch
          %151 = sbr.rel (%p149) target = $region16
        $region15: #{tpu_custom_call.1} parent=11 // pred_region
          %s152 = smul.u32 2, %s26
          %s154 = ssub.s32 256, 256
          %155 = vsyncadd [#allocation8], %s154
          %s156 = smul.addr %s152, 2
          %s157 = smul.addr %s156, 64
          %s158 = scalar_lea.hbm %s1, %s157
          %s159 = sshll.u32 [#allocation7], 4
          %s160 = int_to_ptr.vmem [resolvable:$true] %s159
          %165 = dma.hbm_to_vmem [thread:$0]  %s158, 256, %s160, [#allocation8], 128, 128, 8
        $region16: #{tpu_custom_call.1} parent=11 // pred_fallthru
          _
        // Predicated region
        $region17: #{tpu_custom_call.1} parent=11 // pred_check
          %p166 = pneg %p106
        $region18: #{tpu_custom_call.1} parent=11 // pred_check_branch
          %168 = sbr.rel (%p166) target = $region20
        $region19: #{tpu_custom_call.1} parent=11 // pred_region
          %s169 = smul.u32 2, %s26
          %s171 = ssub.s32 256, 256
          %172 = vsyncadd [#allocation8], %s171
          %s173 = smul.addr %s169, 128
          %s174 = scalar_lea.hbm %s2, %s173
          %s175 = sshll.u32 [#allocation9], 4
          %s176 = int_to_ptr.vmem [resolvable:$true] %s175
          %181 = dma.hbm_to_vmem [thread:$0]  %s174, 256, %s176, [#allocation8], 128, 128, 8
        $region20: #{tpu_custom_call.1} parent=11 // pred_fallthru
          _
      $region12: #{tpu_custom_call.1} parent=5 // pred_fallthru
        _
      %p182 = scmp.lt.s32.totalorder %s16, 2
      // Predicated region
      $region21: #{tpu_custom_call.1} parent=5 // pred_check
        %p183 = pneg %p182
      $region22: #{tpu_custom_call.1} parent=5 // pred_check_branch
        %185 = sbr.rel (%p183) target = $region24
      $region23: #{tpu_custom_call.1} parent=5 // pred_region
        // Predicated region
        $region25: #{tpu_custom_call.1} parent=23 // pred_check
          %p186 = pneg %p48
        $region26: #{tpu_custom_call.1} parent=23 // pred_check_branch
          %188 = sbr.rel (%p186) target = $region28
        $region27: #{tpu_custom_call.1} parent=23 // pred_region
          %s189 = sand.u32 %s38, 1
          %s190 = scalar_lea.sflag [#allocation5], %s189
          %s191 = sand.u32 %s38, 1
          %s192 = smul.addr %s191, 24
          %s193 = scalar_lea.vmem [#allocation4], %s192
          %s195 = ssub.s32 384, 384
          %196 = vsyncadd %s190, %s195
          %s197 = smul.addr %s23, 6
          %s198 = smul.addr %s197, 64
          %s199 = scalar_lea.hbm %s0, %s198
          %s200 = sshll.u32 %s193, 4
          %s201 = int_to_ptr.vmem [resolvable:$true] %s200
          %206 = dma.hbm_to_vmem [thread:$0]  %s199, 384, %s201, %s190, 192, 192, 12
        $region28: #{tpu_custom_call.1} parent=23 // pred_fallthru
          _
      $region24: #{tpu_custom_call.1} parent=5 // pred_fallthru
        _
      %p207 = scmp.le.s32.totalorder 1, %s16
      %p208 = scmp.lt.s32.totalorder %s16, 3
      %p209 = pnand %p207, %p208
      %p210 = pneg %p209
      // Predicated region
      $region29: #{tpu_custom_call.1} parent=5 // pred_check
        _
      $region30: #{tpu_custom_call.1} parent=5 // pred_check_branch
        %212 = sbr.rel (%p209) target = $region32
      $region31: #{tpu_custom_call.1} parent=5 // pred_region
        %s213 = ssub.s32 %s16, 1
        %s214 = sand.u32 %s41, 1
        %s215 = scalar_lea.sflag [#allocation5], %s214
        %s216 = sand.u32 %s41, 1
        %s217 = smul.addr %s216, 24
        %s218 = scalar_lea.vmem [#allocation4], %s217
        // Predicated region
        $region33: #{tpu_custom_call.1} parent=31 // pred_check
          %p219 = pneg %p54
        $region34: #{tpu_custom_call.1} parent=31 // pred_check_branch
          %221 = sbr.rel (%p219) target = $region36
        $region35: #{tpu_custom_call.1} parent=31 // pred_region
          %222 = dma.done %s215, 384
        $region36: #{tpu_custom_call.1} parent=31 // pred_fallthru
          _
        // Predicated region
        $region37: #{tpu_custom_call.1} parent=31 // pred_check
          %p223 = pneg %p80
        $region38: #{tpu_custom_call.1} parent=31 // pred_check_branch
          %225 = sbr.rel (%p223) target = $region40
        $region39: #{tpu_custom_call.1} parent=31 // pred_region
          %226 = dma.done [#allocation8], 256
        $region40: #{tpu_custom_call.1} parent=31 // pred_fallthru
          _
        // Predicated region
        $region41: #{tpu_custom_call.1} parent=31 // pred_check
          %p227 = pneg %p106
        $region42: #{tpu_custom_call.1} parent=31 // pred_check_branch
          %229 = sbr.rel (%p227) target = $region44
        $region43: #{tpu_custom_call.1} parent=31 // pred_region
          %230 = dma.done [#allocation8], 256
        $region44: #{tpu_custom_call.1} parent=31 // pred_fallthru
          _
        %s231 = sand.u32 %s41, 1
        %s232 = scalar_lea.sflag [#allocation5], %s231
        %s233 = sand.u32 %s41, 1
        %s234 = smul.addr %s233, 24
        %s235 = scalar_lea.vmem [#allocation4], %s234
        %p236 = pneg %p54
        %p237 = pneg %p51
        %p238 = pneg %p80
        %p239 = pneg %p77
        %p240 = pneg %p106
        %p241 = pneg %p103
        %p242 = pneg %p134
        %p243 = pneg %p131
        %s244 = sand.u32 %s121, 1
        %s245 = scalar_lea.sflag [#allocation6], %s244
        %s246 = sand.u32 %s121, 1
        %s247 = smul.addr %s246, 32
        %s248 = scalar_lea.vmem [#allocation10], %s247
        %s249 = smul.u32 2, %s26
        %s250 = smul.u32 2, %s26
        %s251 = smul.u32 2, %s26
        %p253 = scmp.eq.s32.totalorder %s26, 0
        // Predicated region
        $region45: #{tpu_custom_call.1} parent=31 // pred_check
          %p254 = pneg %p253
        $region46: #{tpu_custom_call.1} parent=31 // pred_check_branch
          %256 = sbr.rel (%p254) target = $region48
        $region47: #{tpu_custom_call.1} parent=31 // pred_region
          %v257 = vld [vmem:[%s218] sm:$0xff]
          %v258 = vld [vmem:[%s218 + $0x8] sm:$0xf]
          %v259 = vld [vmem:[%s218 + $0xc] sm:$0xff]
          %v260 = vld [vmem:[%s218 + $0x14] sm:$0xf]
          %v265 = vunpack.c.l.b16 %v257
          %v266 = vunpack.c.h.b16 %v257
          %v267 = vunpack.c.l.b16 %v258
          %v268 = vunpack.c.l.b16 %v259
          %v269 = vunpack.c.h.b16 %v259
          %v270 = vunpack.c.l.b16 %v260
          %v271 = vpack.c.b16 %v268, %v265
          %v272 = vpack.c.b16 %v269, %v266
          %v273 = vpack.c.b16 %v270, %v267
          %277 = vst [vmem:[#allocation2] sm:$0xff] %v271
          %278 = vst [vmem:[#allocation2 + $0x8] sm:$0xff] %v272
          %vm279 = vcmask 261120
          %280 = vst.msk [vmem:[#allocation2 + $0x10] sm:$0xff] %vm279, %v273
          %v281 = vld [vmem:[%s218] sm:$0xff]
          %v282 = vld [vmem:[%s218 + $0x8] sm:$0xf]
          %v283 = vld [vmem:[%s218 + $0xc] sm:$0xff]
          %v284 = vld [vmem:[%s218 + $0x14] sm:$0xf]
          %v289 = vunpack.c.l.b16 %v281
          %v290 = vunpack.c.h.b16 %v281
          %v291 = vunpack.c.l.b16 %v282
          %v292 = vunpack.c.l.b16 %v283
          %v293 = vunpack.c.h.b16 %v283
          %v294 = vunpack.c.l.b16 %v284
          %v295 = vpack.c.b16 %v292, %v289
          %v296 = vpack.c.b16 %v293, %v290
          %v297 = vpack.c.b16 %v294, %v291
          %298 = vrot.lane.b32.xlu0 %v295, 127
          %v299 = vpop.permute.xlu0 %298
          %300 = vrot.lane.b32.xlu0 %v296, 127
          %v301 = vpop.permute.xlu0 %300
          %302 = vrot.lane.b32.xlu0 %v297, 127
          %v303 = vpop.permute.xlu0 %302
          %vm304 = vcmask 1039360
          %v305 = vsel %vm304, %v299, %v301
          %v306 = vsel %vm304, %v301, %v303
          %310 = vst [vmem:[#allocation2 + $0x18] sm:$0xff] %v305
          %311 = vst [vmem:[#allocation2 + $0x20] sm:$0xff] %v306
          %312 = vst.msk [vmem:[#allocation2 + $0x28] sm:$0xff] %vm279, %v303
          %v313 = vld [vmem:[%s218] sm:$0xff]
          %v314 = vld [vmem:[%s218 + $0x8] sm:$0xf]
          %v315 = vld [vmem:[%s218 + $0xc] sm:$0xff]
          %v316 = vld [vmem:[%s218 + $0x14] sm:$0xf]
          %v321 = vunpack.c.l.b16 %v313
          %v322 = vunpack.c.h.b16 %v313
          %v323 = vunpack.c.l.b16 %v314
          %v324 = vunpack.c.l.b16 %v315
          %v325 = vunpack.c.h.b16 %v315
          %v326 = vunpack.c.l.b16 %v316
          %v327 = vpack.c.b16 %v324, %v321
          %v328 = vpack.c.b16 %v325, %v322
          %v329 = vpack.c.b16 %v326, %v323
          %330 = vrot.lane.b32.xlu0 %v327, 126
          %v331 = vpop.permute.xlu0 %330
          %332 = vrot.lane.b32.xlu0 %v328, 126
          %v333 = vpop.permute.xlu0 %332
          %334 = vrot.lane.b32.xlu0 %v329, 126
          %v335 = vpop.permute.xlu0 %334
          %vm336 = vcmask 1031168
          %v337 = vsel %vm336, %v331, %v333
          %v338 = vsel %vm336, %v333, %v335
          %342 = vst [vmem:[#allocation2 + $0x30] sm:$0xff] %v337
          %343 = vst [vmem:[#allocation2 + $0x38] sm:$0xff] %v338
          %344 = vst.msk [vmem:[#allocation2 + $0x40] sm:$0xff] %vm279, %v335
          %v345 = vld [vmem:[%s218] sm:$0xff]
          %v346 = vld [vmem:[%s218 + $0x8] sm:$0xf]
          %v347 = vld [vmem:[%s218 + $0xc] sm:$0xff]
          %v348 = vld [vmem:[%s218 + $0x14] sm:$0xf]
          %v353 = vunpack.c.l.b16 %v345
          %v354 = vunpack.c.h.b16 %v345
          %v355 = vunpack.c.l.b16 %v346
          %v356 = vunpack.c.l.b16 %v347
          %v357 = vunpack.c.h.b16 %v347
          %v358 = vunpack.c.l.b16 %v348
          %v359 = vpack.c.b16 %v356, %v353
          %v360 = vpack.c.b16 %v357, %v354
          %v361 = vpack.c.b16 %v358, %v355
          %362 = vrot.lane.b32.xlu0 %v359, 110
          %v363 = vpop.permute.xlu0 %362
          %364 = vrot.lane.b32.xlu0 %v360, 110
          %v365 = vpop.permute.xlu0 %364
          %366 = vrot.lane.b32.xlu0 %v361, 110
          %v367 = vpop.permute.xlu0 %366
          %vm368 = vcmask 900096
          %v369 = vsel %vm368, %v363, %v365
          %v370 = vsel %vm368, %v365, %v367
          %374 = vst [vmem:[#allocation2 + $0x48] sm:$0xff] %v369
          %375 = vst [vmem:[#allocation2 + $0x50] sm:$0xff] %v370
          %376 = vst.msk [vmem:[#allocation2 + $0x58] sm:$0xff] %vm279, %v367
          %v377 = vld [vmem:[%s218] sm:$0xff]
          %v378 = vld [vmem:[%s218 + $0x8] sm:$0xf]
          %v379 = vld [vmem:[%s218 + $0xc] sm:$0xff]
          %v380 = vld [vmem:[%s218 + $0x14] sm:$0xf]
          %v385 = vunpack.c.l.b16 %v377
          %v386 = vunpack.c.h.b16 %v377
          %v387 = vunpack.c.l.b16 %v378
          %v388 = vunpack.c.l.b16 %v379
          %v389 = vunpack.c.h.b16 %v379
          %v390 = vunpack.c.l.b16 %v380
          %v391 = vpack.c.b16 %v388, %v385
          %v392 = vpack.c.b16 %v389, %v386
          %v393 = vpack.c.b16 %v390, %v387
          %394 = vrot.lane.b32.xlu0 %v391, 109
          %v395 = vpop.permute.xlu0 %394
          %396 = vrot.lane.b32.xlu0 %v392, 109
          %v397 = vpop.permute.xlu0 %396
          %398 = vrot.lane.b32.xlu0 %v393, 109
          %v399 = vpop.permute.xlu0 %398
          %vm400 = vcmask 891904
          %v401 = vsel %vm400, %v395, %v397
          %v402 = vsel %vm400, %v397, %v399
          %406 = vst [vmem:[#allocation2 + $0x60] sm:$0xff] %v401
          %407 = vst [vmem:[#allocation2 + $0x68] sm:$0xff] %v402
          %408 = vst.msk [vmem:[#allocation2 + $0x70] sm:$0xff] %vm279, %v399
          %v409 = vld [vmem:[%s218] sm:$0xff]
          %v410 = vld [vmem:[%s218 + $0x8] sm:$0xf]
          %v411 = vld [vmem:[%s218 + $0xc] sm:$0xff]
          %v412 = vld [vmem:[%s218 + $0x14] sm:$0xf]
          %v417 = vunpack.c.l.b16 %v409
          %v418 = vunpack.c.h.b16 %v409
          %v419 = vunpack.c.l.b16 %v410
          %v420 = vunpack.c.l.b16 %v411
          %v421 = vunpack.c.h.b16 %v411
          %v422 = vunpack.c.l.b16 %v412
          %v423 = vpack.c.b16 %v420, %v417
          %v424 = vpack.c.b16 %v421, %v418
          %v425 = vpack.c.b16 %v422, %v419
          %426 = vrot.lane.b32.xlu0 %v423, 108
          %v427 = vpop.permute.xlu0 %426
          %428 = vrot.lane.b32.xlu0 %v424, 108
          %v429 = vpop.permute.xlu0 %428
          %430 = vrot.lane.b32.xlu0 %v425, 108
          %v431 = vpop.permute.xlu0 %430
          %vm432 = vcmask 883712
          %v433 = vsel %vm432, %v427, %v429
          %v434 = vsel %vm432, %v429, %v431
          %438 = vst [vmem:[#allocation2 + $0x78] sm:$0xff] %v433
          %439 = vst [vmem:[#allocation2 + $0x80] sm:$0xff] %v434
          %440 = vst.msk [vmem:[#allocation2 + $0x88] sm:$0xff] %vm279, %v431
          %v441 = vld [vmem:[%s218] sm:$0xff]
          %v442 = vld [vmem:[%s218 + $0x8] sm:$0xf]
          %v443 = vld [vmem:[%s218 + $0xc] sm:$0xff]
          %v444 = vld [vmem:[%s218 + $0x14] sm:$0xf]
          %v449 = vunpack.c.l.b16 %v441
          %v450 = vunpack.c.h.b16 %v441
          %v451 = vunpack.c.l.b16 %v442
          %v452 = vunpack.c.l.b16 %v443
          %v453 = vunpack.c.h.b16 %v443
          %v454 = vunpack.c.l.b16 %v444
          %v455 = vpack.c.b16 %v452, %v449
          %v456 = vpack.c.b16 %v453, %v450
          %v457 = vpack.c.b16 %v454, %v451
          %458 = vrot.lane.b32.xlu0 %v455, 92
          %v459 = vpop.permute.xlu0 %458
          %460 = vrot.lane.b32.xlu0 %v456, 92
          %v461 = vpop.permute.xlu0 %460
          %462 = vrot.lane.b32.xlu0 %v457, 92
          %v463 = vpop.permute.xlu0 %462
          %vm464 = vcmask 752640
          %v465 = vsel %vm464, %v459, %v461
          %v466 = vsel %vm464, %v461, %v463
          %470 = vst [vmem:[#allocation2 + $0x90] sm:$0xff] %v465
          %471 = vst [vmem:[#allocation2 + $0x98] sm:$0xff] %v466
          %472 = vst.msk [vmem:[#allocation2 + $0xa0] sm:$0xff] %vm279, %v463
          %v473 = vld [vmem:[%s218] sm:$0xff]
          %v474 = vld [vmem:[%s218 + $0x8] sm:$0xf]
          %v475 = vld [vmem:[%s218 + $0xc] sm:$0xff]
          %v476 = vld [vmem:[%s218 + $0x14] sm:$0xf]
          %v481 = vunpack.c.l.b16 %v473
          %v482 = vunpack.c.h.b16 %v473
          %v483 = vunpack.c.l.b16 %v474
          %v484 = vunpack.c.l.b16 %v475
          %v485 = vunpack.c.h.b16 %v475
          %v486 = vunpack.c.l.b16 %v476
          %v487 = vpack.c.b16 %v484, %v481
          %v488 = vpack.c.b16 %v485, %v482
          %v489 = vpack.c.b16 %v486, %v483
          %490 = vrot.lane.b32.xlu0 %v487, 91
          %v491 = vpop.permute.xlu0 %490
          %492 = vrot.lane.b32.xlu0 %v488, 91
          %v493 = vpop.permute.xlu0 %492
          %494 = vrot.lane.b32.xlu0 %v489, 91
          %v495 = vpop.permute.xlu0 %494
          %vm496 = vcmask 744448
          %v497 = vsel %vm496, %v491, %v493
          %v498 = vsel %vm496, %v493, %v495
          %502 = vst [vmem:[#allocation2 + $0xa8] sm:$0xff] %v497
          %503 = vst [vmem:[#allocation2 + $0xb0] sm:$0xff] %v498
          %504 = vst.msk [vmem:[#allocation2 + $0xb8] sm:$0xff] %vm279, %v495
          %v505 = vld [vmem:[%s218] sm:$0xff]
          %v506 = vld [vmem:[%s218 + $0x8] sm:$0xf]
          %v507 = vld [vmem:[%s218 + $0xc] sm:$0xff]
          %v508 = vld [vmem:[%s218 + $0x14] sm:$0xf]
          %v513 = vunpack.c.l.b16 %v505
          %v514 = vunpack.c.h.b16 %v505
          %v515 = vunpack.c.l.b16 %v506
          %v516 = vunpack.c.l.b16 %v507
          %v517 = vunpack.c.h.b16 %v507
          %v518 = vunpack.c.l.b16 %v508
          %v519 = vpack.c.b16 %v516, %v513
          %v520 = vpack.c.b16 %v517, %v514
          %v521 = vpack.c.b16 %v518, %v515
          %522 = vrot.lane.b32.xlu0 %v519, 90
          %v523 = vpop.permute.xlu0 %522
          %524 = vrot.lane.b32.xlu0 %v520, 90
          %v525 = vpop.permute.xlu0 %524
          %526 = vrot.lane.b32.xlu0 %v521, 90
          %v527 = vpop.permute.xlu0 %526
          %vm528 = vcmask 736256
          %v529 = vsel %vm528, %v523, %v525
          %v530 = vsel %vm528, %v525, %v527
          %534 = vst [vmem:[#allocation2 + $0xc0] sm:$0xff] %v529
          %535 = vst [vmem:[#allocation2 + $0xc8] sm:$0xff] %v530
          %536 = vst.msk [vmem:[#allocation2 + $0xd0] sm:$0xff] %vm279, %v527
        $region48: #{tpu_custom_call.1} parent=31 // pred_fallthru
          _
        %v537 = vld [vmem:[#allocation7] sm:$0xff]
        %v538 = vld [vmem:[#allocation7 + $0x8] sm:$0xff]
        %v539 = vld [vmem:[#allocation2] sm:$0xff]
        %v540 = vld [vmem:[#allocation2 + $0x8] sm:$0xff]
        %v541 = vld [vmem:[#allocation2 + $0x10] sm:$0xff]
        %v542 = vld [vmem:[#allocation2 + $0x18] sm:$0xff]
        %v543 = vld [vmem:[#allocation2 + $0x20] sm:$0xff]
        %v544 = vld [vmem:[#allocation2 + $0x28] sm:$0xff]
        %v545 = vld [vmem:[#allocation2 + $0x30] sm:$0xff]
        %v546 = vld [vmem:[#allocation2 + $0x38] sm:$0xff]
        %v547 = vld [vmem:[#allocation2 + $0x40] sm:$0xff]
        %v548 = vld [vmem:[#allocation2 + $0x48] sm:$0xff]
        %v549 = vld [vmem:[#allocation2 + $0x50] sm:$0xff]
        %v550 = vld [vmem:[#allocation2 + $0x58] sm:$0xff]
        %v551 = vld [vmem:[#allocation2 + $0x60] sm:$0xff]
        %v552 = vld [vmem:[#allocation2 + $0x68] sm:$0xff]
        %v553 = vld [vmem:[#allocation2 + $0x70] sm:$0xff]
        %v554 = vld [vmem:[#allocation2 + $0x78] sm:$0xff]
        %v555 = vld [vmem:[#allocation2 + $0x80] sm:$0xff]
        %v556 = vld [vmem:[#allocation2 + $0x88] sm:$0xff]
        %v557 = vld [vmem:[#allocation2 + $0x90] sm:$0xff]
        %v558 = vld [vmem:[#allocation2 + $0x98] sm:$0xff]
        %v559 = vld [vmem:[#allocation2 + $0xa0] sm:$0xff]
        %v560 = vld [vmem:[#allocation2 + $0xa8] sm:$0xff]
        %v561 = vld [vmem:[#allocation2 + $0xb0] sm:$0xff]
        %v562 = vld [vmem:[#allocation2 + $0xb8] sm:$0xff]
        %v563 = vld [vmem:[#allocation2 + $0xc0] sm:$0xff]
        %v564 = vld [vmem:[#allocation2 + $0xc8] sm:$0xff]
        %v565 = vld [vmem:[#allocation2 + $0xd0] sm:$0xff]
        %v568 = vunpack.c.l.b16 %v537
        %v569 = vunpack.c.h.b16 %v537
        %v570 = vunpack.c.l.b16 %v538
        %v571 = vunpack.c.h.b16 %v538
        %v572 = vpack.c.b16 %v570, %v568
        %v573 = vpack.c.b16 %v571, %v569
        %vm575 = vcmask 130048
        %v577 = vsel %vm575, %v573, 0
        %579 = vmatprep.subr.bf16.mxu0 %v540
        %580 = vmatpush1.bf16.msra.mxu0 %v539
        %581 = vmatprep.subr.bf16.mxu0 %v543
        %582 = vmatpush1.bf16.msra.mxu0 %v542
        %583 = vmatprep.subr.bf16.mxu0 %v546
        %584 = vmatpush1.bf16.msra.mxu0 %v545
        %585 = vmatprep.subr.bf16.mxu0 %v549
        %586 = vmatpush1.bf16.msra.mxu0 %v548
        %587 = vmatprep.subr.bf16.mxu0 %v552
        %588 = vmatpush1.bf16.msra.mxu0 %v551
        %589 = vmatprep.subr.bf16.mxu0 %v555
        %590 = vmatpush1.bf16.msra.mxu0 %v554
        %591 = vmatprep.subr.bf16.mxu0 %v558
        %592 = vmatpush1.bf16.msra.mxu0 %v557
        %593 = vmatprep.subr.bf16.mxu0 %v561
        %594 = vmatpush1.bf16.msra.mxu0 %v560
        %595 = vmatprep.subr.bf16.mxu0 %v564
        %596 = vmatpush1.bf16.msra.mxu0 %v563
        %597 = vmatprep.subr.bf16.mxu0 0
        %598 = vmatpush1.bf16.msra.mxu0 0
        %599 = vmatprep.subr.bf16.mxu0 0
        %600 = vmatpush1.bf16.msra.mxu0 0
        %601 = vmatprep.subr.bf16.mxu0 0
        %602 = vmatpush1.bf16.msra.mxu0 0
        %603 = vmatprep.subr.bf16.mxu0 0
        %604 = vmatpush1.bf16.msra.mxu0 0
        %605 = vmatprep.subr.bf16.mxu0 0
        %606 = vmatpush1.bf16.msra.mxu0 0
        %607 = vmatprep.subr.bf16.mxu0 0
        %608 = vmatpush1.bf16.msra.mxu0 0
        %609 = vmatprep.subr.bf16.mxu0 0
        %610 = vmatpush1.bf16.msra.mxu0 0
        %611 = vmatprep.mubr.bf16.mxu0 %v577
        %612 = vmatmul.mubr.bf16.gmra.mrb[0].mxu0 %v572
        %v613 = vpop.f32.mrb[0].mxu0
        %v614 = vadd.f32 0.0, %v613
        %v615 = vpop.f32.mrb[0].mxu0
        %v616 = vadd.f32 0.0, %v615
        %v617 = vpop.f32.mrb[0].mxu0
        %v618 = vadd.f32 0.0, %v617
        %v619 = vpop.f32.mrb[0].mxu0
        %v620 = vadd.f32 0.0, %v619
        %621 = vdwg.mxu0
        %622 = vmatprep.subr.bf16.mxu0 0
        %623 = vmatpush1.bf16.msra.mxu0 %v541
        %624 = vmatprep.subr.bf16.mxu0 0
        %625 = vmatpush1.bf16.msra.mxu0 %v544
        %626 = vmatprep.subr.bf16.mxu0 0
        %627 = vmatpush1.bf16.msra.mxu0 %v547
        %628 = vmatprep.subr.bf16.mxu0 0
        %629 = vmatpush1.bf16.msra.mxu0 %v550
        %630 = vmatprep.subr.bf16.mxu0 0
        %631 = vmatpush1.bf16.msra.mxu0 %v553
        %632 = vmatprep.subr.bf16.mxu0 0
        %633 = vmatpush1.bf16.msra.mxu0 %v556
        %634 = vmatprep.subr.bf16.mxu0 0
        %635 = vmatpush1.bf16.msra.mxu0 %v559
        %636 = vmatprep.subr.bf16.mxu0 0
        %637 = vmatpush1.bf16.msra.mxu0 %v562
        %638 = vmatprep.subr.bf16.mxu0 0
        %639 = vmatpush1.bf16.msra.mxu0 %v565
        %640 = vmatprep.subr.bf16.mxu0 0
        %641 = vmatpush1.bf16.msra.mxu0 0
        %642 = vmatprep.subr.bf16.mxu0 0
        %643 = vmatpush1.bf16.msra.mxu0 0
        %644 = vmatprep.subr.bf16.mxu0 0
        %645 = vmatpush1.bf16.msra.mxu0 0
        %646 = vmatprep.subr.bf16.mxu0 0
        %647 = vmatpush1.bf16.msra.mxu0 0
        %648 = vmatprep.subr.bf16.mxu0 0
        %649 = vmatpush1.bf16.msra.mxu0 0
        %650 = vmatprep.subr.bf16.mxu0 0
        %651 = vmatpush1.bf16.msra.mxu0 0
        %652 = vmatprep.subr.bf16.mxu0 0
        %653 = vmatpush1.bf16.msra.mxu0 0
        %654 = vmatprep.mubr.bf16.mxu0 %v577
        %655 = vmatmul.mubr.bf16.gmra.mrb[0].mxu0 %v572
        %v656 = vpop.f32.mrb[0].mxu0
        %v657 = vadd.f32 0.0, %v656
        %v658 = vpop.f32.mrb[0].mxu0
        %v659 = vpop.f32.mrb[0].mxu0
        %v660 = vadd.f32 0.0, %v659
        %v661 = vpop.f32.mrb[0].mxu0
        %662 = vdwg.mxu0
        %663 = vst.msk [vmem:[#allocation3] sm:$0xff] %vm575, %v614
        %664 = vst.msk [vmem:[#allocation3 + $0x10] sm:$0xff] %vm575, %v618
        %667 = vrot.lane.b32.xlu0 %v614, 126
        %v668 = vpop.permute.xlu0 %667
        %669 = vrot.lane.b32.xlu0 %v618, 126
        %v670 = vpop.permute.xlu0 %669
        %vm673 = vcmask 261248
        %674 = vst.msk [vmem:[#allocation3] sm:$0xff] %vm673, %v668
        %675 = vst.msk [vmem:[#allocation3 + $0x10] sm:$0xff] %vm673, %v670
        %676 = vrot.lane.b32.xlu0 %v614, 124
        %v677 = vpop.permute.xlu0 %676
        %678 = vrot.lane.b32.xlu0 %v618, 124
        %v679 = vpop.permute.xlu0 %678
        %vm682 = vcmask 392448
        %683 = vst.msk [vmem:[#allocation3] sm:$0xff] %vm682, %v677
        %684 = vst.msk [vmem:[#allocation3 + $0x10] sm:$0xff] %vm682, %v679
        %685 = vrot.lane.b32.xlu0 %v614, 122
        %v686 = vpop.permute.xlu0 %685
        %687 = vrot.lane.b32.xlu0 %v618, 122
        %v688 = vpop.permute.xlu0 %687
        %vm691 = vcmask 523648
        %692 = vst.msk [vmem:[#allocation3] sm:$0xff] %vm691, %v686
        %693 = vst.msk [vmem:[#allocation3 + $0x10] sm:$0xff] %vm691, %v688
        %694 = vrot.lane.b32.xlu0 %v614, 120
        %v695 = vpop.permute.xlu0 %694
        %696 = vrot.lane.b32.xlu0 %v618, 120
        %v697 = vpop.permute.xlu0 %696
        %vm700 = vcmask 654848
        %701 = vst.msk [vmem:[#allocation3] sm:$0xff] %vm700, %v695
        %702 = vst.msk [vmem:[#allocation3 + $0x10] sm:$0xff] %vm700, %v697
        %703 = vrot.lane.b32.xlu0 %v614, 118
        %v704 = vpop.permute.xlu0 %703
        %705 = vrot.lane.b32.xlu0 %v618, 118
        %v706 = vpop.permute.xlu0 %705
        %vm709 = vcmask 786048
        %710 = vst.msk [vmem:[#allocation3] sm:$0xff] %vm709, %v704
        %711 = vst.msk [vmem:[#allocation3 + $0x10] sm:$0xff] %vm709, %v706
        %712 = vrot.lane.b32.xlu0 %v614, 116
        %v713 = vpop.permute.xlu0 %712
        %714 = vrot.lane.b32.xlu0 %v618, 116
        %v715 = vpop.permute.xlu0 %714
        %vm718 = vcmask 917248
        %719 = vst.msk [vmem:[#allocation3] sm:$0xff] %vm718, %v713
        %720 = vst.msk [vmem:[#allocation3 + $0x10] sm:$0xff] %vm718, %v715
        %723 = vrot.lane.b32.xlu0 %v614, 114
        %v724 = vpop.permute.xlu0 %723
        %725 = vrot.lane.b32.xlu0 %v616, 114
        %v726 = vpop.permute.xlu0 %725
        %727 = vrot.lane.b32.xlu0 %v618, 114
        %v728 = vpop.permute.xlu0 %727
        %729 = vrot.lane.b32.xlu0 %v620, 114
        %v730 = vpop.permute.xlu0 %729
        %vm731 = vcmask 932864
        %v732 = vsel %vm731, %v724, %v726
        %v733 = vsel %vm731, %v728, %v730
        %vm736 = vcmask 1048448
        %737 = vst.msk [vmem:[#allocation3] sm:$0xff] %vm736, %v732
        %738 = vst.msk [vmem:[#allocation3 + $0x10] sm:$0xff] %vm736, %v733
        %739 = vrot.lane.b32.xlu0 %v616, 112
        %v740 = vpop.permute.xlu0 %739
        %741 = vrot.lane.b32.xlu0 %v620, 112
        %v742 = vpop.permute.xlu0 %741
        %745 = vst.msk [vmem:[#allocation3 + $0x8] sm:$0xff] %vm575, %v740
        %746 = vst.msk [vmem:[#allocation3 + $0x18] sm:$0xff] %vm575, %v742
        %747 = vrot.lane.b32.xlu0 %v616, 110
        %v748 = vpop.permute.xlu0 %747
        %749 = vrot.lane.b32.xlu0 %v620, 110
        %v750 = vpop.permute.xlu0 %749
        %753 = vst.msk [vmem:[#allocation3 + $0x8] sm:$0xff] %vm673, %v748
        %754 = vst.msk [vmem:[#allocation3 + $0x18] sm:$0xff] %vm673, %v750
        %755 = vrot.lane.b32.xlu0 %v616, 108
        %v756 = vpop.permute.xlu0 %755
        %757 = vrot.lane.b32.xlu0 %v620, 108
        %v758 = vpop.permute.xlu0 %757
        %761 = vst.msk [vmem:[#allocation3 + $0x8] sm:$0xff] %vm682, %v756
        %762 = vst.msk [vmem:[#allocation3 + $0x18] sm:$0xff] %vm682, %v758
        %763 = vrot.lane.b32.xlu0 %v616, 106
        %v764 = vpop.permute.xlu0 %763
        %765 = vrot.lane.b32.xlu0 %v620, 106
        %v766 = vpop.permute.xlu0 %765
        %769 = vst.msk [vmem:[#allocation3 + $0x8] sm:$0xff] %vm691, %v764
        %770 = vst.msk [vmem:[#allocation3 + $0x18] sm:$0xff] %vm691, %v766
        %771 = vrot.lane.b32.xlu0 %v616, 104
        %v772 = vpop.permute.xlu0 %771
        %773 = vrot.lane.b32.xlu0 %v620, 104
        %v774 = vpop.permute.xlu0 %773
        %777 = vst.msk [vmem:[#allocation3 + $0x8] sm:$0xff] %vm700, %v772
        %778 = vst.msk [vmem:[#allocation3 + $0x18] sm:$0xff] %vm700, %v774
        %779 = vrot.lane.b32.xlu0 %v616, 102
        %v780 = vpop.permute.xlu0 %779
        %781 = vrot.lane.b32.xlu0 %v620, 102
        %v782 = vpop.permute.xlu0 %781
        %785 = vst.msk [vmem:[#allocation3 + $0x8] sm:$0xff] %vm709, %v780
        %786 = vst.msk [vmem:[#allocation3 + $0x18] sm:$0xff] %vm709, %v782
        %789 = vrot.lane.b32.xlu0 %v616, 100
        %v790 = vpop.permute.xlu0 %789
        %791 = vrot.lane.b32.xlu0 %v657, 100
        %v792 = vpop.permute.xlu0 %791
        %793 = vrot.lane.b32.xlu0 %v620, 100
        %v794 = vpop.permute.xlu0 %793
        %795 = vrot.lane.b32.xlu0 %v660, 100
        %v796 = vpop.permute.xlu0 %795
        %vm797 = vcmask 818176
        %v798 = vsel %vm797, %v790, %v792
        %v799 = vsel %vm797, %v794, %v796
        %802 = vst.msk [vmem:[#allocation3 + $0x8] sm:$0xff] %vm718, %v798
        %803 = vst.msk [vmem:[#allocation3 + $0x18] sm:$0xff] %vm718, %v799
        %804 = vrot.lane.b32.xlu0 %v657, 98
        %v805 = vpop.permute.xlu0 %804
        %806 = vrot.lane.b32.xlu0 %v660, 98
        %v807 = vpop.permute.xlu0 %806
        %810 = vst.msk [vmem:[#allocation3 + $0x8] sm:$0xff] %vm736, %v805
        %811 = vst.msk [vmem:[#allocation3 + $0x18] sm:$0xff] %vm736, %v807
        %v812 = vld [vmem:[#allocation3] sm:$0xff]
        %v813 = vld [vmem:[#allocation3 + $0x8] sm:$0xff]
        %v814 = vld [vmem:[#allocation3 + $0x10] sm:$0xff]
        %v815 = vld [vmem:[#allocation3 + $0x18] sm:$0xff]
        %v816 = vadd.f32 %v812, %v813
        %817 = vadd.xlane.f32.xlu0 %v816
        %v818 = vpop.xlane.xlu0 %817
        %v819 = vadd.f32 %v814, %v815
        %820 = vadd.xlane.f32.xlu0 %v819
        %v821 = vpop.xlane.xlu0 %820
        %v822 = vmul.f32 %v812, %v812
        %v823 = vmul.f32 %v813, %v813
        %v824 = vmul.f32 %v814, %v814
        %v825 = vmul.f32 %v815, %v815
        %v826 = vadd.f32 %v822, %v823
        %827 = vadd.xlane.f32.xlu0 %v826
        %v828 = vpop.xlane.xlu0 %827
        %v829 = vadd.f32 %v824, %v825
        %830 = vadd.xlane.f32.xlu0 %v829
        %v831 = vpop.xlane.xlu0 %830
        %v832 = vld [vmem:[#allocation9] sm:$0xff]
        %v833 = vld [vmem:[#allocation9 + $0x8] sm:$0xff]
        %v834 = vmul.f32 %v832, 256.0
        %v835 = vmul.f32 %v833, 256.0
        %v836 = vadd.f32 %v818, %v834
        %v837 = vadd.f32 %v821, %v835
        %v838 = vmul.f32 %v832, 2.0
        %v839 = vmul.f32 %v833, 2.0
        %v840 = vmul.f32 %v838, %v818
        %v841 = vmul.f32 %v839, %v821
        %v842 = vadd.f32 %v828, %v840
        %v843 = vadd.f32 %v831, %v841
        %v844 = vmul.f32 %v834, %v832
        %v845 = vmul.f32 %v835, %v833
        %v846 = vadd.f32 %v842, %v844
        %v847 = vadd.f32 %v843, %v845
        %v848 = vlaneseq
        %v849 = vshrl.u32 %v848, 7
        %v850 = vadd.s32 %v849, 8
        %v851 = vlaneseq
        %v852 = vand.u32 %v851, 127
        %vm853 = vcmp.ge.s32.totalorder %v849, 2
        %vm854 = vcmp.ge.s32.totalorder %v850, 2
        %v855 = vsel %vm853, 1, 0
        %v856 = vsel %vm854, 1, 0
        %v857 = vcvt.s32.f32 %v855
        %v858 = vcvt.s32.f32 %v856
        %v859 = vadd.f32 %v857, 0.0
        %v860 = vadd.f32 %v858, 0.0
        %vm861 = vcmp.ge.s32.totalorder %v852, 2
        %v862 = vsel %vm861, 1, 0
        %v863 = vcvt.s32.f32 %v862
        %v864 = vadd.f32 %v863, 0.0
        %vm865 = vcmp.ge.s32.totalorder %v849, 4
        %vm866 = vcmp.ge.s32.totalorder %v850, 4
        %v867 = vsel %vm865, 1, 0
        %v868 = vsel %vm866, 1, 0
        %v869 = vcvt.s32.f32 %v867
        %v870 = vcvt.s32.f32 %v868
        %v871 = vadd.f32 %v859, %v869
        %v872 = vadd.f32 %v860, %v870
        %vm873 = vcmp.ge.s32.totalorder %v852, 4
        %v874 = vsel %vm873, 1, 0
        %v875 = vcvt.s32.f32 %v874
        %v876 = vadd.f32 %v864, %v875
        %vm877 = vcmp.ge.s32.totalorder %v849, 6
        %vm878 = vcmp.ge.s32.totalorder %v850, 6
        %v879 = vsel %vm877, 1, 0
        %v880 = vsel %vm878, 1, 0
        %v881 = vcvt.s32.f32 %v879
        %v882 = vcvt.s32.f32 %v880
        %v883 = vadd.f32 %v871, %v881
        %v884 = vadd.f32 %v872, %v882
        %vm885 = vcmp.ge.s32.totalorder %v852, 6
        %v886 = vsel %vm885, 1, 0
        %v887 = vcvt.s32.f32 %v886
        %v888 = vadd.f32 %v876, %v887
        %vm889 = vcmp.ge.s32.totalorder %v849, 8
        %vm890 = vcmp.ge.s32.totalorder %v850, 8
        %v891 = vsel %vm889, 1, 0
        %v892 = vsel %vm890, 1, 0
        %v893 = vcvt.s32.f32 %v891
        %v894 = vcvt.s32.f32 %v892
        %v895 = vadd.f32 %v883, %v893
        %v896 = vadd.f32 %v884, %v894
        %vm897 = vcmp.ge.s32.totalorder %v852, 8
        %v898 = vsel %vm897, 1, 0
        %v899 = vcvt.s32.f32 %v898
        %v900 = vadd.f32 %v888, %v899
        %vm901 = vcmp.ge.s32.totalorder %v849, 10
        %vm902 = vcmp.ge.s32.totalorder %v850, 10
        %v903 = vsel %vm901, 1, 0
        %v904 = vsel %vm902, 1, 0
        %v905 = vcvt.s32.f32 %v903
        %v906 = vcvt.s32.f32 %v904
        %v907 = vadd.f32 %v895, %v905
        %v908 = vadd.f32 %v896, %v906
        %vm909 = vcmp.ge.s32.totalorder %v852, 10
        %v910 = vsel %vm909, 1, 0
        %v911 = vcvt.s32.f32 %v910
        %v912 = vadd.f32 %v900, %v911
        %vm913 = vcmp.ge.s32.totalorder %v849, 12
        %vm914 = vcmp.ge.s32.totalorder %v850, 12
        %v915 = vsel %vm913, 1, 0
        %v916 = vsel %vm914, 1, 0
        %v917 = vcvt.s32.f32 %v915
        %v918 = vcvt.s32.f32 %v916
        %v919 = vadd.f32 %v907, %v917
        %v920 = vadd.f32 %v908, %v918
        %vm921 = vcmp.ge.s32.totalorder %v852, 12
        %v922 = vsel %vm921, 1, 0
        %v923 = vcvt.s32.f32 %v922
        %v924 = vadd.f32 %v912, %v923
        %vm925 = vcmp.ge.s32.totalorder %v849, 14
        %vm926 = vcmp.ge.s32.totalorder %v850, 14
        %v927 = vsel %vm925, 1, 0
        %v928 = vsel %vm926, 1, 0
        %v929 = vcvt.s32.f32 %v927
        %v930 = vcvt.s32.f32 %v928
        %v931 = vadd.f32 %v919, %v929
        %v932 = vadd.f32 %v920, %v930
        %vm933 = vcmp.ge.s32.totalorder %v852, 14
        %v934 = vsel %vm933, 1, 0
        %v935 = vcvt.s32.f32 %v934
        %v936 = vadd.f32 %v924, %v935
        %vm937 = vcmp.eq.f32.partialorder %v931, %v936
        %vm938 = vcmp.eq.f32.partialorder %v932, %v936
        %v939 = vsel %vm937, 1, 0
        %v940 = vsel %vm938, 1, 0
        %v941 = vcvt.s32.f32 %v939
        %v942 = vcvt.s32.f32 %v940
        %v944 = vsel %vm575, %v941, 0
        %v947 = vsel %vm575, %v942, 0
        %949 = vmatprep.subr.mxu0 0.0
        %950 = vmatpush1.msra.mxu0 %v836
        %951 = vmatprep.subr.mxu0 0.0
        %952 = vmatpush1.msra.mxu0 %v837
        %953 = vmatprep.subr.mxu0 0.0
        %954 = vmatpush1.msra.mxu0 0.0
        %955 = vmatprep.subr.mxu0 0.0
        %956 = vmatpush1.msra.mxu0 0.0
        %957 = vmatprep.subr.mxu0 0.0
        %958 = vmatpush1.msra.mxu0 0.0
        %959 = vmatprep.subr.mxu0 0.0
        %960 = vmatpush1.msra.mxu0 0.0
        %961 = vmatprep.subr.mxu0 0.0
        %962 = vmatpush1.msra.mxu0 0.0
        %963 = vmatprep.subr.mxu0 0.0
        %964 = vmatpush1.msra.mxu0 0.0
        %965 = vmatprep.subr.mxu0 0.0
        %966 = vmatpush1.msra.mxu0 0.0
        %967 = vmatprep.subr.mxu0 0.0
        %968 = vmatpush1.msra.mxu0 0.0
        %969 = vmatprep.subr.mxu0 0.0
        %970 = vmatpush1.msra.mxu0 0.0
        %971 = vmatprep.subr.mxu0 0.0
        %972 = vmatpush1.msra.mxu0 0.0
        %973 = vmatprep.subr.mxu0 0.0
        %974 = vmatpush1.msra.mxu0 0.0
        %975 = vmatprep.subr.mxu0 0.0
        %976 = vmatpush1.msra.mxu0 0.0
        %977 = vmatprep.subr.mxu0 0.0
        %978 = vmatpush1.msra.mxu0 0.0
        %979 = vmatprep.subr.mxu0 0.0
        %980 = vmatpush1.msra.mxu0 0.0
        %981 = vmatprep.subr.mxu0 0.0
        %982 = vmatpush1.msra.mxu0 0.0
        %983 = vmatprep.subr.mxu0 0.0
        %984 = vmatpush1.msra.mxu0 0.0
        %985 = vmatprep.subr.mxu0 0.0
        %986 = vmatpush1.msra.mxu0 0.0
        %987 = vmatprep.subr.mxu0 0.0
        %988 = vmatpush1.msra.mxu0 0.0
        %989 = vmatprep.subr.mxu0 0.0
        %990 = vmatpush1.msra.mxu0 0.0
        %991 = vmatprep.subr.mxu0 0.0
        %992 = vmatpush1.msra.mxu0 0.0
        %993 = vmatprep.subr.mxu0 0.0
        %994 = vmatpush1.msra.mxu0 0.0
        %995 = vmatprep.subr.mxu0 0.0
        %996 = vmatpush1.msra.mxu0 0.0
        %997 = vmatprep.subr.mxu0 0.0
        %998 = vmatpush1.msra.mxu0 0.0
        %999 = vmatprep.subr.mxu0 0.0
        %1000 = vmatpush1.msra.mxu0 0.0
        %1001 = vmatprep.subr.mxu0 0.0
        %1002 = vmatpush1.msra.mxu0 0.0
        %1003 = vmatprep.subr.mxu0 0.0
        %1004 = vmatpush1.msra.mxu0 0.0
        %1005 = vmatprep.subr.mxu0 0.0
        %1006 = vmatpush1.msra.mxu0 0.0
        %1007 = vmatprep.subr.mxu0 0.0
        %1008 = vmatpush1.msra.mxu0 0.0
        %1009 = vmatprep.subr.mxu0 0.0
        %1010 = vmatpush1.msra.mxu0 0.0
        %1011 = vmatprep.subr.mxu0 0.0
        %1012 = vmatpush1.msra.mxu0 0.0
        %1013 = vmatprep.mubr.f32.mxu0 0.0
        %1014 = vmatmul.mubr.f32.gmra.mrb[0].mxu0 %v944
        %v1015 = vpop.f32.mrb[0].mxu0
        %v1016 = vadd.f32 0.0, %v1015
        %v1017 = vpop.f32.mrb[0].mxu0
        %1018 = vmatprep.mubr.f32.mxu0 0.0
        %1019 = vmatmul.mubr.f32.gmra.mrb[0].mxu0 %v947
        %v1020 = vpop.f32.mrb[0].mxu0
        %v1021 = vadd.f32 0.0, %v1020
        %v1022 = vpop.f32.mrb[0].mxu0
        %1023 = vdwg.mxu0
        %v1024 = vmul.f32 %v1016, 0.001953125
        %v1025 = vmul.f32 %v1021, 0.001953125
        %1026 = vmatprep.subr.mxu0 0.0
        %1027 = vmatpush1.msra.mxu0 %v846
        %1028 = vmatprep.subr.mxu0 0.0
        %1029 = vmatpush1.msra.mxu0 %v847
        %1030 = vmatprep.subr.mxu0 0.0
        %1031 = vmatpush1.msra.mxu0 0.0
        %1032 = vmatprep.subr.mxu0 0.0
        %1033 = vmatpush1.msra.mxu0 0.0
        %1034 = vmatprep.subr.mxu0 0.0
        %1035 = vmatpush1.msra.mxu0 0.0
        %1036 = vmatprep.subr.mxu0 0.0
        %1037 = vmatpush1.msra.mxu0 0.0
        %1038 = vmatprep.subr.mxu0 0.0
        %1039 = vmatpush1.msra.mxu0 0.0
        %1040 = vmatprep.subr.mxu0 0.0
        %1041 = vmatpush1.msra.mxu0 0.0
        %1042 = vmatprep.subr.mxu0 0.0
        %1043 = vmatpush1.msra.mxu0 0.0
        %1044 = vmatprep.subr.mxu0 0.0
        %1045 = vmatpush1.msra.mxu0 0.0
        %1046 = vmatprep.subr.mxu0 0.0
        %1047 = vmatpush1.msra.mxu0 0.0
        %1048 = vmatprep.subr.mxu0 0.0
        %1049 = vmatpush1.msra.mxu0 0.0
        %1050 = vmatprep.subr.mxu0 0.0
        %1051 = vmatpush1.msra.mxu0 0.0
        %1052 = vmatprep.subr.mxu0 0.0
        %1053 = vmatpush1.msra.mxu0 0.0
        %1054 = vmatprep.subr.mxu0 0.0
        %1055 = vmatpush1.msra.mxu0 0.0
        %1056 = vmatprep.subr.mxu0 0.0
        %1057 = vmatpush1.msra.mxu0 0.0
        %1058 = vmatprep.subr.mxu0 0.0
        %1059 = vmatpush1.msra.mxu0 0.0
        %1060 = vmatprep.subr.mxu0 0.0
        %1061 = vmatpush1.msra.mxu0 0.0
        %1062 = vmatprep.subr.mxu0 0.0
        %1063 = vmatpush1.msra.mxu0 0.0
        %1064 = vmatprep.subr.mxu0 0.0
        %1065 = vmatpush1.msra.mxu0 0.0
        %1066 = vmatprep.subr.mxu0 0.0
        %1067 = vmatpush1.msra.mxu0 0.0
        %1068 = vmatprep.subr.mxu0 0.0
        %1069 = vmatpush1.msra.mxu0 0.0
        %1070 = vmatprep.subr.mxu0 0.0
        %1071 = vmatpush1.msra.mxu0 0.0
        %1072 = vmatprep.subr.mxu0 0.0
        %1073 = vmatpush1.msra.mxu0 0.0
        %1074 = vmatprep.subr.mxu0 0.0
        %1075 = vmatpush1.msra.mxu0 0.0
        %1076 = vmatprep.subr.mxu0 0.0
        %1077 = vmatpush1.msra.mxu0 0.0
        %1078 = vmatprep.subr.mxu0 0.0
        %1079 = vmatpush1.msra.mxu0 0.0
        %1080 = vmatprep.subr.mxu0 0.0
        %1081 = vmatpush1.msra.mxu0 0.0
        %1082 = vmatprep.subr.mxu0 0.0
        %1083 = vmatpush1.msra.mxu0 0.0
        %1084 = vmatprep.subr.mxu0 0.0
        %1085 = vmatpush1.msra.mxu0 0.0
        %1086 = vmatprep.subr.mxu0 0.0
        %1087 = vmatpush1.msra.mxu0 0.0
        %1088 = vmatprep.subr.mxu0 0.0
        %1089 = vmatpush1.msra.mxu0 0.0
        %1090 = vmatprep.mubr.f32.mxu0 0.0
        %1091 = vmatmul.mubr.f32.gmra.mrb[0].mxu0 %v944
        %v1092 = vpop.f32.mrb[0].mxu0
        %v1093 = vadd.f32 0.0, %v1092
        %v1094 = vpop.f32.mrb[0].mxu0
        %1095 = vmatprep.mubr.f32.mxu0 0.0
        %1096 = vmatmul.mubr.f32.gmra.mrb[0].mxu0 %v947
        %v1097 = vpop.f32.mrb[0].mxu0
        %v1098 = vadd.f32 0.0, %v1097
        %v1099 = vpop.f32.mrb[0].mxu0
        %1100 = vdwg.mxu0
        %v1101 = vmul.f32 %v1093, 0.001953125
        %v1102 = vmul.f32 %v1098, 0.001953125
        %v1103 = vmul.f32 %v1024, %v1024
        %v1104 = vmul.f32 %v1025, %v1025
        %v1105 = vsub.f32 %v1101, %v1103
        %v1106 = vsub.f32 %v1102, %v1104
        %v1107 = vmax.f32 %v1105, 0.0
        %v1108 = vmax.f32 %v1106, 0.0
        %v1109 = vadd.f32 %v1107, 1e-05
        %v1110 = vadd.f32 %v1108, 1e-05
        %v1111 = vrsqrt.pop %v1109
        %v1112 = vrsqrt.pop %v1110
        %1115 = vrot.lane.b32.xlu0 %v832, 127
        %v1116 = vpop.permute.xlu0 %1115
        %1117 = vrot.lane.b32.xlu0 %v833, 127
        %v1118 = vpop.permute.xlu0 %1117
        %v1121 = vmul.f32 %v1111, %v1116
        %v1122 = vmul.f32 %v1112, %v1118
        %v1123 = vsub.f32 %v832, %v1024
        %v1124 = vsub.f32 %v833, %v1025
        %v1125 = vmul.f32 %v1123, %v1121
        %v1126 = vmul.f32 %v1124, %v1122
        %1129 = vrot.lane.b32.xlu0 %v1125, 2
        %v1130 = vpop.permute.xlu0 %1129
        %1131 = vrot.lane.b32.xlu0 %v1126, 2
        %v1132 = vpop.permute.xlu0 %1131
        %v1135 = vadd.f32 %v832, %v1130
        %v1136 = vadd.f32 %v833, %v1132
        %1138 = vset.pattern.permute.xlu0 0
        %1139 = vperm.xlu0 %1138, %v1121
        %v1140 = vpop.permute.xlu0 %1139
        %1143 = vset.pattern.permute.xlu0 0
        %1144 = vperm.xlu0 %1143, %v1122
        %v1145 = vpop.permute.xlu0 %1144
        %v1147 = vmul.f32 %v812, %v1140
        %v1148 = vmul.f32 %v813, %v1140
        %v1149 = vmul.f32 %v814, %v1145
        %v1150 = vmul.f32 %v815, %v1145
        %1152 = vset.pattern.permute.xlu0 2
        %1153 = vperm.xlu0 %1152, %v1135
        %v1154 = vpop.permute.xlu0 %1153
        %1157 = vset.pattern.permute.xlu0 2
        %1158 = vperm.xlu0 %1157, %v1136
        %v1159 = vpop.permute.xlu0 %1158
        %v1161 = vadd.f32 %v1147, %v1154
        %v1162 = vadd.f32 %v1148, %v1154
        %v1163 = vadd.f32 %v1149, %v1159
        %v1164 = vadd.f32 %v1150, %v1159
        %v1165 = vand.u32 2147483647, %v1161
        %v1166 = vand.u32 2147483647, %v1162
        %v1167 = vand.u32 2147483647, %v1163
        %v1168 = vand.u32 2147483647, %v1164
        %v1169 = vsub.f32 0.0, %v1165
        %v1170 = vsub.f32 0.0, %v1166
        %v1171 = vsub.f32 0.0, %v1167
        %v1172 = vsub.f32 0.0, %v1168
        %v1173 = vmul.f32 %v1169, 1.442695
        %v1174 = vpow.pop %v1173
        %v1175 = vmul.f32 %v1170, 1.442695
        %v1176 = vpow.pop %v1175
        %v1177 = vmul.f32 %v1171, 1.442695
        %v1178 = vpow.pop %v1177
        %v1179 = vmul.f32 %v1172, 1.442695
        %v1180 = vpow.pop %v1179
        %v1181 = vmul.f32 %v1174, %v1174
        %v1182 = vmul.f32 %v1176, %v1176
        %v1183 = vmul.f32 %v1178, %v1178
        %v1184 = vmul.f32 %v1180, %v1180
        %vm1185 = vcmp.ge.f32.partialorder %v1161, 0.0
        %vm1186 = vcmp.ge.f32.partialorder %v1162, 0.0
        %vm1187 = vcmp.ge.f32.partialorder %v1163, 0.0
        %vm1188 = vcmp.ge.f32.partialorder %v1164, 0.0
        %v1189 = vsel %vm1185, 1.0, %v1181
        %v1190 = vsel %vm1186, 1.0, %v1182
        %v1191 = vsel %vm1187, 1.0, %v1183
        %v1192 = vsel %vm1188, 1.0, %v1184
        %v1193 = vmul.f32 %v1174, 2.0
        %v1194 = vmul.f32 %v1176, 2.0
        %v1195 = vmul.f32 %v1178, 2.0
        %v1196 = vmul.f32 %v1180, 2.0
        %v1197 = vadd.f32 %v1189, %v1193
        %v1198 = vadd.f32 %v1190, %v1194
        %v1199 = vadd.f32 %v1191, %v1195
        %v1200 = vadd.f32 %v1192, %v1196
        %v1201 = vmul.f32 %v1181, 2.0
        %v1202 = vmul.f32 %v1182, 2.0
        %v1203 = vmul.f32 %v1183, 2.0
        %v1204 = vmul.f32 %v1184, 2.0
        %v1205 = vsel %vm1185, %v1201, 2.0
        %v1206 = vsel %vm1186, %v1202, 2.0
        %v1207 = vsel %vm1187, %v1203, 2.0
        %v1208 = vsel %vm1188, %v1204, 2.0
        %v1209 = vadd.f32 %v1197, %v1205
        %v1210 = vadd.f32 %v1198, %v1206
        %v1211 = vadd.f32 %v1199, %v1207
        %v1212 = vadd.f32 %v1200, %v1208
        %v1213 = vmul.f32 %v1161, %v1197
        %v1214 = vmul.f32 %v1162, %v1198
        %v1215 = vmul.f32 %v1163, %v1199
        %v1216 = vmul.f32 %v1164, %v1200
        %v1217 = vrcp.pop %v1209
        %v1218 = vrcp.pop %v1210
        %v1219 = vrcp.pop %v1211
        %v1220 = vrcp.pop %v1212
        %v1221 = vmul.f32 %v1213, %v1217
        %v1222 = vmul.f32 %v1214, %v1218
        %v1223 = vmul.f32 %v1215, %v1219
        %v1224 = vmul.f32 %v1216, %v1220
        %1225 = vst [vmem:[%s248] sm:$0xff] %v1221
        %1226 = vst [vmem:[%s248 + $0x8] sm:$0xff] %v1222
        %1227 = vst [vmem:[%s248 + $0x10] sm:$0xff] %v1223
        %1228 = vst [vmem:[%s248 + $0x18] sm:$0xff] %v1224
        %s1229 = sand.u32 %s121, 1
        %s1230 = scalar_lea.sflag [#allocation6], %s1229
        %s1231 = sand.u32 %s121, 1
        %s1232 = smul.addr %s1231, 32
        %s1233 = scalar_lea.vmem [#allocation10], %s1232
        // Predicated region
        $region49: #{tpu_custom_call.1} parent=31 // pred_check
          %p1234 = pneg %p131
        $region50: #{tpu_custom_call.1} parent=31 // pred_check_branch
          %1236 = sbr.rel (%p1234) target = $region52
        $region51: #{tpu_custom_call.1} parent=31 // pred_region
          %s1237 = smul.u32 2, %s26
          %s1239 = ssub.s32 512, 512
          %1240 = vsyncadd %s1230, %s1239
          %s1241 = smul.addr %s1237, 2
          %s1242 = smul.addr %s25, 4
          %s1243 = sadd.s32 %s1241, %s1242
          %s1244 = smul.addr %s1243, 128
          %s1245 = scalar_lea.hbm %s3, %s1244
          %s1246 = sshll.u32 %s1233, 4
          %s1247 = int_to_ptr.vmem [resolvable:$true] %s1246
          %1252 = dma.vmem_to_hbm [thread:$0]  %s1247, 512, %s1245, %s1230, 256, 256, 16
        $region52: #{tpu_custom_call.1} parent=31 // pred_fallthru
          _
      $region32: #{tpu_custom_call.1} parent=5 // pred_fallthru
        _
      %p1253 = scmp.le.s32.totalorder 2, %s16
      // Predicated region
      $region53: #{tpu_custom_call.1} parent=5 // pred_check
        %p1254 = pneg %p1253
      $region54: #{tpu_custom_call.1} parent=5 // pred_check_branch
        %1256 = sbr.rel (%p1254) target = $region56
      $region55: #{tpu_custom_call.1} parent=5 // pred_region
        %s1257 = ssub.s32 %s16, 2
        // Predicated region
        $region57: #{tpu_custom_call.1} parent=55 // pred_check
          %p1258 = pneg %p137
        $region58: #{tpu_custom_call.1} parent=55 // pred_check_branch
          %1260 = sbr.rel (%p1258) target = $region60
        $region59: #{tpu_custom_call.1} parent=55 // pred_region
          %s1261 = sand.u32 %s122, 1
          %s1262 = scalar_lea.sflag [#allocation6], %s1261
          %s1263 = sand.u32 %s122, 1
          %s1264 = smul.addr %s1263, 32
          %s1265 = scalar_lea.vmem [#allocation10], %s1264
          %1266 = dma.done %s1262, 512
        $region60: #{tpu_custom_call.1} parent=55 // pred_fallthru
          _
      $region56: #{tpu_custom_call.1} parent=5 // pred_fallthru
        _
    $region6: #{tpu_custom_call.1} parent=1 // loop_footer
      %s20 = sadd.s32 1, %s16
    $region7: #{tpu_custom_call.1} parent=1 // loop_footer_branch
      %15 = sbr.rel target = $region3
    $region8: #{tpu_custom_call.1} parent=1 // loop_exit
      _
    %1267 = vsyncpa [#allocation5], 1
    %s1268 = scalar_lea.sflag [#allocation5], 1
    %1269 = vsyncpa %s1268, 1
    %1270 = vsyncpa [#allocation8], 1
    %1271 = vsyncpa [#allocation6], 1
    %s1272 = scalar_lea.sflag [#allocation6], 1
    %1273 = vsyncpa %s1272, 1

</llo_original>
